<compile_context>
chip_gen: v7x
topology: tpu7x:2x2x1
jax: 0.10.0
libtpu: 0.0.40
codegen_flags: <defaults>
</compile_context>

<pallas_src>
import functools

import jax
import jax.numpy as jnp
from jax import lax
from jax.experimental import pallas as pl
from jax.experimental.pallas import tpu as pltpu

LANE = 128
SUBLANE = 8


def _round_up(x, m):
    return (x + m - 1) // m * m


def _prep2d(a, rows, cols, dtype):
    """Cast + zero-pad a 2-D array to (rows, cols).

    No-op (zero copies) when the array already has the requested shape/dtype;
    otherwise the cast is fused into the single pad copy.
    """
    a = jnp.asarray(a)
    if a.dtype != dtype:
        a = a.astype(dtype)
    r, c = a.shape
    if (r, c) != (rows, cols):
        a = jnp.pad(a, ((0, rows - r), (0, cols - c)))
    return a


def _choose_batch_tiling(b, block_batch, min_steps=2):
    """Pick (tile_rows, padded_rows) for the 1-D batch grid.

    Preference order:
      1. no wrapper-side batch pad copy (tile divides the 8-aligned batch),
      2. >= min_steps grid steps (lets v7x shard the parallel axis over 2 TCs),
      3. the largest tile <= block_batch (amortizes ~0.35us per-grid-step cost).
    """
    b8 = _round_up(b, SUBLANE)
    cap = max(SUBLANE, min(block_batch, b8) // SUBLANE * SUBLANE)
    div_multi, div_any = None, None
    for tb in range(cap, SUBLANE - 1, -SUBLANE):
        if b8 % tb == 0:
            if div_any is None:
                div_any = tb
            if b8 // tb >= min_steps:
                div_multi = tb
                break
    tb = div_multi or div_any or cap
    if tb * 8 < cap:
        # Pathological divisor structure (e.g. 8 * prime): accept a small batch
        # pad and use big tiles instead of an overhead-bound tiny-tile grid.
        if b8 // cap >= min_steps:
            tb = cap
        else:
            tb = max(SUBLANE, _round_up(b8 // min_steps, SUBLANE))
    return tb, _round_up(b8, tb)


# --------------------------- kernel bodies ----------------------------------

def _shared_and_project(ctx_ref, cho_ref, w1_ref, b1_ref, w2_ref, b2_ref,
                        wp1_ref, wp2_ref, bp_ref, cdt):
    """SharedMapping (L2(relu(L1(.)))) on ctx & cho + split projector.

    Weights/inputs arrive already in `cdt`; accumulation is always f32.
    Returns proj (tb, D) in f32.  No stacked concatenate: two back-to-back
    matmuls reuse the same resident w1/w2.
    """
    def shared(x_ref):
        h = jnp.dot(x_ref[...], w1_ref[...], preferred_element_type=jnp.float32)
        h = jnp.maximum(h + b1_ref[...], 0.0).astype(cdt)
        f = jnp.dot(h, w2_ref[...], preferred_element_type=jnp.float32)
        return f + b2_ref[...]

    f_ctx = shared(ctx_ref)
    f_cho = shared(cho_ref)
    # projector(cat([f_ctx, f_cho], -1)) == f_ctx @ Wp_top + f_cho @ Wp_bot + bp
    return (jnp.dot(f_ctx.astype(cdt), wp1_ref[...],
                    preferred_element_type=jnp.float32)
            + jnp.dot(f_cho.astype(cdt), wp2_ref[...],
                      preferred_element_type=jnp.float32)
            + bp_ref[...])


def _pal_kernel_avec(ctx_ref, cho_ref, w1_ref, b1_ref, w2_ref, b2_ref,
                     wp1_ref, wp2_ref, bp_ref, a_ref, out_ref, *, compute_dtype):
    """user_id=None or scalar user_id: a_i is a single broadcast (1, D) vector."""
    proj = _shared_and_project(ctx_ref, cho_ref, w1_ref, b1_ref, w2_ref, b2_ref,
                               wp1_ref, wp2_ref, bp_ref, compute_dtype)
    # reward row = a_i . proj[b, :]  ->  (1, D) contracted with (tb, D) over D.
    # One K=D MXU pass whose result is lane-major => lane-dense stores.
    r = lax.dot_general(a_ref[...], proj.astype(compute_dtype),
                        dimension_numbers=(((1,), (1,)), ((), ())),
                        preferred_element_type=jnp.float32)          # (1, tb)
    out_ref[...] = r[None]                                           # (1, 1, tb)


def _pal_kernel_user(ctx_ref, cho_ref, w1_ref, b1_ref, w2_ref, b2_ref,
                     wp1_ref, wp2_ref, bp_ref, uw_ref, protoT_ref, out_ref,
                     *, compute_dtype):
    """Per-row user_id: reward = rowsum(uw * (proj @ proto^T)), K = D on the MXU."""
    proj = _shared_and_project(ctx_ref, cho_ref, w1_ref, b1_ref, w2_ref, b2_ref,
                               wp1_ref, wp2_ref, bp_ref, compute_dtype)
    s = jnp.dot(proj.astype(compute_dtype), protoT_ref[...],
                preferred_element_type=jnp.float32)                  # (tb, P)
    out_ref[...] = jnp.sum(uw_ref[...] * s, axis=1, keepdims=True)   # (tb, 1)


# --------------------------- params ------------------------------------------

def init_params(key, input_dim, output_dim, num_prototypes, num_users):
    ks = jax.random.split(key, 8)
    # Linear weights stored as (in, out) so the kernel computes x @ W + b.
    w1 = jax.random.normal(ks[0], (input_dim, output_dim), jnp.float32) * 0.1
    b1 = jax.random.normal(ks[1], (1, output_dim), jnp.float32) * 0.1
    w2 = jax.random.normal(ks[2], (output_dim, output_dim), jnp.float32) * 0.1
    b2 = jax.random.normal(ks[3], (1, output_dim), jnp.float32) * 0.1
    wp = jax.random.normal(ks[4], (2 * output_dim, output_dim), jnp.float32) * 0.1
    bp = jax.random.normal(ks[5], (1, output_dim), jnp.float32) * 0.1
    prototypes = jax.random.normal(ks[6], (num_prototypes, output_dim), jnp.float32)
    user_weights = jax.random.uniform(ks[7], (num_users, num_prototypes), jnp.float32)
    return {
        "w1": w1, "b1": b1, "w2": w2, "b2": b2,
        "wp_top": wp[:output_dim], "wp_bot": wp[output_dim:], "bp": bp,
        "prototypes": prototypes, "user_weights": user_weights,
    }


def pad_params(params, dtype=jnp.float32):
    """Zero-pad feature dims to multiples of 128 and cast weights to `dtype`.

    Padding rows/cols are zero so they contribute exactly 0 to the reward.
    Biases stay f32 (added to the f32 accumulator).  dtype=jnp.bfloat16 halves
    HBM/VMEM traffic for weights and (via the wrapper) the streamed inputs;
    accumulation in-kernel is always f32.
    """
    din, d = params["w1"].shape
    p = params["prototypes"].shape[0]
    din_p, d_p = _round_up(din, LANE), _round_up(d, LANE)
    return {
        "w1": _prep2d(params["w1"], din_p, d_p, dtype),
        "b1": _prep2d(params["b1"], 1, d_p, jnp.float32),
        "w2": _prep2d(params["w2"], d_p, d_p, dtype),
        "b2": _prep2d(params["b2"], 1, d_p, jnp.float32),
        "wp_top": _prep2d(params["wp_top"], d_p, d_p, dtype),
        "wp_bot": _prep2d(params["wp_bot"], d_p, d_p, dtype),
        "bp": _prep2d(params["bp"], 1, d_p, jnp.float32),
        "protoT": _prep2d(params["prototypes"].T, d_p, p, dtype),        # (D_p, P)
        "proto_mean": _prep2d(params["prototypes"].mean(0, keepdims=True),
                              1, d_p, dtype),
        # kept unpadded (f32) for the scalar-user a_i precompute / per-row gather
        "prototypes": jnp.asarray(params["prototypes"], jnp.float32),
        "user_weights": jnp.asarray(params["user_weights"], jnp.float32),
    }


# --------------------------- wrapper ------------------------------------------

def pal_a_contextual_forward(pparams, context, choice_embed, user_id=None,
                             *, block_batch=1024):
    """Fused forward.  context/choice_embed: (B, input_dim).  Returns (B,) f32.

    The streamed/MXU-operand dtype is taken from pparams (pad_params(dtype=...)):
    float32 (default, tight agreement with the reference) or bfloat16 (~1e-2
    relative deviation, ~2x less HBM traffic).  Accumulation is always f32.
    """
    cdt = pparams["w1"].dtype
    din_p, d_p = pparams["w1"].shape
    p = pparams["user_weights"].shape[1]
    b = jnp.asarray(context).shape[0]

    tb, bp_rows = _choose_batch_tiling(b, block_batch)
    num_tiles = bp_rows // tb
    grid = (num_tiles,)

    # Cast + pad fused into (at most) one copy each; zero copies when the input
    # is already (bp_rows, din_p) in the streaming dtype.
    ctx = _prep2d(context, bp_rows, din_p, cdt)
    cho = _prep2d(choice_embed, bp_rows, din_p, cdt)

    row_in = pl.BlockSpec((tb, din_p), lambda i: (i, 0))

    def resident(shape):
        # Constant block index -> fetched once, resident in VMEM across the grid.
        # (v7x + large output_dim: add pipeline_mode=pl.Buffered(1) to single-buffer.)
        return pl.BlockSpec(shape, lambda i: (0, 0))

    weight_ops = (pparams["w1"], pparams["b1"], pparams["w2"], pparams["b2"],
                  pparams["wp_top"], pparams["wp_bot"], pparams["bp"])
    weight_specs = [resident(tuple(w.shape)) for w in weight_ops]

    uid = None if user_id is None else jnp.asarray(user_id)
    if uid is None or uid.ndim == 0:
        # Broadcast a_i: prototype mean, or (scalar user) uw[uid] @ prototypes
        # precomputed in the wrapper -> no K=4 matmul and no uw stream in-kernel.
        if uid is None:
            a_vec = pparams["proto_mean"]                                  # (1, D_p)
        else:
            a_raw = pparams["user_weights"][uid] @ pparams["prototypes"]   # (D,)
            a_vec = _prep2d(a_raw[None, :], 1, d_p, cdt)
        kernel = functools.partial(_pal_kernel_avec, compute_dtype=cdt)
        extra_ops = (a_vec,)
        extra_specs = [resident((1, d_p))]
        out_shape = jax.ShapeDtypeStruct((num_tiles, 1, tb), jnp.float32)
        out_spec = pl.BlockSpec((1, 1, tb), lambda i: (i, 0, 0))
        finalize = lambda o: o.reshape(-1)[:b]
    else:
        uw = pparams["user_weights"][uid]                                  # (B, P) f32
        if bp_rows != b:
            uw = jnp.pad(uw, ((0, bp_rows - b), (0, 0)))
        kernel = functools.partial(_pal_kernel_user, compute_dtype=cdt)
        extra_ops = (uw, pparams["protoT"])
        extra_specs = [pl.BlockSpec((tb, p), lambda i: (i, 0)), resident((d_p, p))]
        out_shape = jax.ShapeDtypeStruct((bp_rows, 1), jnp.float32)
        out_spec = pl.BlockSpec((tb, 1), lambda i: (i, 0))
        finalize = lambda o: o[:b, 0]

    operands = (ctx, cho, *weight_ops, *extra_ops)

    # Advisory cost estimate, re-derived from the actual operand dtypes/shapes.
    flops = int(4 * bp_rows * din_p * d_p       # L1 on ctx + cho
                + 8 * bp_rows * d_p * d_p       # L2 + split projector
                + 2 * bp_rows * d_p * max(p, 1) # final D-contraction
                + 2 * bp_rows * max(p, 1))
    bytes_accessed = int(sum(int(x.size) * x.dtype.itemsize for x in operands)
                         + bp_rows * 4)
    cost = pl.CostEstimate(flops=flops, transcendentals=0,
                           bytes_accessed=bytes_accessed)

    # Explicit VMEM budget: streamed blocks double-buffered, f32 intermediates.
    isz = jnp.dtype(cdt).itemsize
    est = (2 * 2 * tb * din_p * isz
           + 2 * sum(int(x.size) * x.dtype.itemsize for x in (*weight_ops, *extra_ops))
           + 6 * tb * d_p * 4
           + 2 * bp_rows * 4 + 2 * 2 * tb * p * 4)
    vmem_limit = int(min(64 * 1024 * 1024, max(32 * 1024 * 1024, 2 * est)))

    out = pl.pallas_call(
        kernel,
        out_shape=out_shape,
        grid=grid,
        in_specs=[row_in, row_in] + weight_specs + extra_specs,
        out_specs=out_spec,
        compiler_params=pltpu.CompilerParams(
            dimension_semantics=("parallel",),
            vmem_limit_bytes=vmem_limit),
        cost_estimate=cost,
    )(*operands)
    return finalize(out)


# --------------------------- reference & test ---------------------------------

def _reference_forward(params, context, choice_embed, user_id=None):
    """Pure-JAX reference mirroring the PyTorch module."""
    def shared(x):
        h = jnp.maximum(x @ params["w1"] + params["b1"], 0.0)
        return h @ params["w2"] + params["b2"]
    f_ctx = shared(context)
    f_cho = shared(choice_embed)
    proj = f_ctx @ params["wp_top"] + f_cho @ params["wp_bot"] + params["bp"]
    if user_id is None:
        a_i = params["prototypes"].mean(axis=0)
    else:
        a_i = params["user_weights"][jnp.asarray(user_id)] @ params["prototypes"]
    return jnp.sum(proj * a_i, axis=-1)


def _max_rel_err(a, b):
    return float(jnp.max(jnp.abs(a - b)) / jnp.maximum(jnp.max(jnp.abs(b)), 1e-6))


if __name__ == "__main__":
    # Config 1: batch / feature dims NOT 128-aligned -> exercises the fused
    # cast+pad path and a multi-step grid (5 tiles of 40 rows).
    B, INPUT_DIM, OUTPUT_DIM = 200, 96, 96
    NUM_PROTOTYPES, NUM_USERS = 4, 5

    key = jax.random.PRNGKey(0)
    kp, kc, kx, ku, kp2, kc2, kx2 = jax.random.split(key, 7)
    params = init_params(kp, INPUT_DIM, OUTPUT_DIM, NUM_PROTOTYPES, NUM_USERS)
    pp32 = pad_params(params, jnp.float32)          # f32 default: reference accuracy

    context = jax.random.normal(kc, (B, INPUT_DIM), jnp.float32)
    choice = jax.random.normal(kx, (B, INPUT_DIM), jnp.float32)
    user_vec = jax.random.randint(ku, (B,), 0, NUM_USERS)

    # ---- f32 (default) path ----
    r = jax.block_until_ready(pal_a_contextual_forward(pp32, context, choice, user_vec))
    ref = _reference_forward(params, context, choice, user_vec)
    assert r.shape == (B,)
    assert _max_rel_err(r, ref) < 2e-3, _max_rel_err(r, ref)

    # scalar user_id -> wrapper precomputes a_i, broadcast-a_i kernel
    r_s = jax.block_until_ready(pal_a_contextual_forward(pp32, context, choice, 3))
    ref_s = _reference_forward(params, context, choice, 3)
    assert _max_rel_err(r_s, ref_s) < 2e-3, _max_rel_err(r_s, ref_s)

    # user_id=None -> prototype mean, broadcast-a_i kernel (lane-dense output)
    r_n = jax.block_until_ready(pal_a_contextual_forward(pp32, context, choice, None))
    ref_n = _reference_forward(params, context, choice, None)
    assert _max_rel_err(r_n, ref_n) < 2e-3, _max_rel_err(r_n, ref_n)

    # ---- bf16 streaming (opt-in): half the HBM traffic, f32 accumulation ----
    pp16 = pad_params(params, jnp.bfloat16)
    r_bf = jax.block_until_ready(pal_a_contextual_forward(pp16, context, choice, user_vec))
    assert _max_rel_err(r_bf, ref) < 3e-2, _max_rel_err(r_bf, ref)
    r_bf_n = jax.block_until_ready(pal_a_contextual_forward(pp16, context, choice, None))
    assert _max_rel_err(r_bf_n, ref_n) < 3e-2, _max_rel_err(r_bf_n, ref_n)

    # Config 2: 128-aligned dims & tile-divisible batch -> zero wrapper copies,
    # 2 grid steps of 128 rows (both v7x TensorCores busy).
    B2, D2 = 256, 128
    params2 = init_params(kp2, D2, D2, NUM_PROTOTYPES, NUM_USERS)
    pp2 = pad_params(params2, jnp.float32)
    ctx2 = jax.random.normal(kc2, (B2, D2), jnp.float32)
    cho2 = jax.random.normal(kx2, (B2, D2), jnp.float32)

    r2 = jax.block_until_ready(pal_a_contextual_forward(pp2, ctx2, cho2, 1))
    ref2 = _reference_forward(params2, ctx2, cho2, 1)
    assert _max_rel_err(r2, ref2) < 2e-3, _max_rel_err(r2, ref2)

    uid2 = jnp.arange(B2) % NUM_USERS
    r2v = jax.block_until_ready(pal_a_contextual_forward(pp2, ctx2, cho2, uid2))
    ref2v = _reference_forward(params2, ctx2, cho2, uid2)
    assert _max_rel_err(r2v, ref2v) < 2e-3, _max_rel_err(r2v, ref2v)

    print("KERNEL_OK")
</pallas_src>

<mosaic_0001>
module attributes {stable_mosaic.version = 11 : i64} {
  func.func @_pal_kernel_user(%arg0: i32, %arg1: memref<40x128xf32, #tpu.memory_space<vmem>>, %arg2: memref<40x128xf32, #tpu.memory_space<vmem>>, %arg3: memref<128x128xf32, #tpu.memory_space<vmem>>, %arg4: memref<1x128xf32, #tpu.memory_space<vmem>>, %arg5: memref<128x128xf32, #tpu.memory_space<vmem>>, %arg6: memref<1x128xf32, #tpu.memory_space<vmem>>, %arg7: memref<128x128xf32, #tpu.memory_space<vmem>>, %arg8: memref<128x128xf32, #tpu.memory_space<vmem>>, %arg9: memref<1x128xf32, #tpu.memory_space<vmem>>, %arg10: memref<40x4xf32, #tpu.memory_space<vmem>>, %arg11: memref<128x4xf32, #tpu.memory_space<vmem>>, %arg12: memref<40x1xf32, #tpu.memory_space<vmem>>) attributes {dimension_semantics = [#tpu.dimension_semantics<parallel>], iteration_bounds = array<i64: 5>, scalar_prefetch = 0 : i64, scratch_operands = 0 : i64, tpu.core_type = #tpu.core_type<tc>, window_params = [{transform_indices = @transform_0, window_bounds = array<i64: 40, 128>}, {transform_indices = @transform_1, window_bounds = array<i64: 40, 128>}, {pipeline_mode = #tpu.pipeline_mode<synchronous>, transform_indices = @transform_2, window_bounds = array<i64: 128, 128>}, {pipeline_mode = #tpu.pipeline_mode<synchronous>, transform_indices = @transform_3, window_bounds = array<i64: 1, 128>}, {pipeline_mode = #tpu.pipeline_mode<synchronous>, transform_indices = @transform_4, window_bounds = array<i64: 128, 128>}, {pipeline_mode = #tpu.pipeline_mode<synchronous>, transform_indices = @transform_5, window_bounds = array<i64: 1, 128>}, {pipeline_mode = #tpu.pipeline_mode<synchronous>, transform_indices = @transform_6, window_bounds = array<i64: 128, 128>}, {pipeline_mode = #tpu.pipeline_mode<synchronous>, transform_indices = @transform_7, window_bounds = array<i64: 128, 128>}, {pipeline_mode = #tpu.pipeline_mode<synchronous>, transform_indices = @transform_8, window_bounds = array<i64: 1, 128>}, {transform_indices = @transform_9, window_bounds = array<i64: 40, 4>}, {pipeline_mode = #tpu.pipeline_mode<synchronous>, transform_indices = @transform_10, window_bounds = array<i64: 128, 4>}, {transform_indices = @transform_11, window_bounds = array<i64: 40, 1>}]} {
    %c0 = arith.constant 0 : index
    %c0_0 = arith.constant 0 : index
    %0 = vector.load %arg1[%c0, %c0_0] : memref<40x128xf32, #tpu.memory_space<vmem>>, vector<40x128xf32>
    %c0_1 = arith.constant 0 : index
    %c0_2 = arith.constant 0 : index
    %1 = vector.load %arg3[%c0_1, %c0_2] : memref<128x128xf32, #tpu.memory_space<vmem>>, vector<128x128xf32>
    %cst = arith.constant dense<0.000000e+00> : vector<40x128xf32>
    %2 = tpu.matmul %0, %1, %cst {dimension_numbers = #tpu.dot_dimension_numbers<[1], [0], [0], [1], [0, 0, 1, 1], [], []>} : vector<40x128xf32>, vector<128x128xf32>, vector<40x128xf32> -> vector<40x128xf32>
    %c0_3 = arith.constant 0 : index
    %c0_4 = arith.constant 0 : index
    %3 = vector.load %arg4[%c0_3, %c0_4] : memref<1x128xf32, #tpu.memory_space<vmem>>, vector<1x128xf32>
    %4 = vector.broadcast %3 : vector<1x128xf32> to vector<40x128xf32>
    %5 = arith.addf %2, %4 : vector<40x128xf32>
    %cst_5 = arith.constant 0.000000e+00 : f32
    %6 = vector.broadcast %cst_5 : f32 to vector<40x128xf32>
    %7 = arith.maximumf %5, %6 : vector<40x128xf32>
    %c0_6 = arith.constant 0 : index
    %c0_7 = arith.constant 0 : index
    %8 = vector.load %arg5[%c0_6, %c0_7] : memref<128x128xf32, #tpu.memory_space<vmem>>, vector<128x128xf32>
    %cst_8 = arith.constant dense<0.000000e+00> : vector<40x128xf32>
    %9 = tpu.matmul %7, %8, %cst_8 {dimension_numbers = #tpu.dot_dimension_numbers<[1], [0], [0], [1], [0, 0, 1, 1], [], []>} : vector<40x128xf32>, vector<128x128xf32>, vector<40x128xf32> -> vector<40x128xf32>
    %c0_9 = arith.constant 0 : index
    %c0_10 = arith.constant 0 : index
    %10 = vector.load %arg6[%c0_9, %c0_10] : memref<1x128xf32, #tpu.memory_space<vmem>>, vector<1x128xf32>
    %11 = vector.broadcast %10 : vector<1x128xf32> to vector<40x128xf32>
    %12 = arith.addf %9, %11 : vector<40x128xf32>
    %c0_11 = arith.constant 0 : index
    %c0_12 = arith.constant 0 : index
    %13 = vector.load %arg2[%c0_11, %c0_12] : memref<40x128xf32, #tpu.memory_space<vmem>>, vector<40x128xf32>
    %c0_13 = arith.constant 0 : index
    %c0_14 = arith.constant 0 : index
    %14 = vector.load %arg3[%c0_13, %c0_14] : memref<128x128xf32, #tpu.memory_space<vmem>>, vector<128x128xf32>
    %cst_15 = arith.constant dense<0.000000e+00> : vector<40x128xf32>
    %15 = tpu.matmul %13, %14, %cst_15 {dimension_numbers = #tpu.dot_dimension_numbers<[1], [0], [0], [1], [0, 0, 1, 1], [], []>} : vector<40x128xf32>, vector<128x128xf32>, vector<40x128xf32> -> vector<40x128xf32>
    %c0_16 = arith.constant 0 : index
    %c0_17 = arith.constant 0 : index
    %16 = vector.load %arg4[%c0_16, %c0_17] : memref<1x128xf32, #tpu.memory_space<vmem>>, vector<1x128xf32>
    %17 = vector.broadcast %16 : vector<1x128xf32> to vector<40x128xf32>
    %18 = arith.addf %15, %17 : vector<40x128xf32>
    %cst_18 = arith.constant 0.000000e+00 : f32
    %19 = vector.broadcast %cst_18 : f32 to vector<40x128xf32>
    %20 = arith.maximumf %18, %19 : vector<40x128xf32>
    %c0_19 = arith.constant 0 : index
    %c0_20 = arith.constant 0 : index
    %21 = vector.load %arg5[%c0_19, %c0_20] : memref<128x128xf32, #tpu.memory_space<vmem>>, vector<128x128xf32>
    %cst_21 = arith.constant dense<0.000000e+00> : vector<40x128xf32>
    %22 = tpu.matmul %20, %21, %cst_21 {dimension_numbers = #tpu.dot_dimension_numbers<[1], [0], [0], [1], [0, 0, 1, 1], [], []>} : vector<40x128xf32>, vector<128x128xf32>, vector<40x128xf32> -> vector<40x128xf32>
    %c0_22 = arith.constant 0 : index
    %c0_23 = arith.constant 0 : index
    %23 = vector.load %arg6[%c0_22, %c0_23] : memref<1x128xf32, #tpu.memory_space<vmem>>, vector<1x128xf32>
    %24 = vector.broadcast %23 : vector<1x128xf32> to vector<40x128xf32>
    %25 = arith.addf %22, %24 : vector<40x128xf32>
    %c0_24 = arith.constant 0 : index
    %c0_25 = arith.constant 0 : index
    %26 = vector.load %arg7[%c0_24, %c0_25] : memref<128x128xf32, #tpu.memory_space<vmem>>, vector<128x128xf32>
    %cst_26 = arith.constant dense<0.000000e+00> : vector<40x128xf32>
    %27 = tpu.matmul %12, %26, %cst_26 {dimension_numbers = #tpu.dot_dimension_numbers<[1], [0], [0], [1], [0, 0, 1, 1], [], []>} : vector<40x128xf32>, vector<128x128xf32>, vector<40x128xf32> -> vector<40x128xf32>
    %c0_27 = arith.constant 0 : index
    %c0_28 = arith.constant 0 : index
    %28 = vector.load %arg8[%c0_27, %c0_28] : memref<128x128xf32, #tpu.memory_space<vmem>>, vector<128x128xf32>
    %cst_29 = arith.constant dense<0.000000e+00> : vector<40x128xf32>
    %29 = tpu.matmul %25, %28, %cst_29 {dimension_numbers = #tpu.dot_dimension_numbers<[1], [0], [0], [1], [0, 0, 1, 1], [], []>} : vector<40x128xf32>, vector<128x128xf32>, vector<40x128xf32> -> vector<40x128xf32>
    %30 = arith.addf %27, %29 : vector<40x128xf32>
    %c0_30 = arith.constant 0 : index
    %c0_31 = arith.constant 0 : index
    %31 = vector.load %arg9[%c0_30, %c0_31] : memref<1x128xf32, #tpu.memory_space<vmem>>, vector<1x128xf32>
    %32 = vector.broadcast %31 : vector<1x128xf32> to vector<40x128xf32>
    %33 = arith.addf %30, %32 : vector<40x128xf32>
    %c0_32 = arith.constant 0 : index
    %c0_33 = arith.constant 0 : index
    %34 = vector.load %arg11[%c0_32, %c0_33] : memref<128x4xf32, #tpu.memory_space<vmem>>, vector<128x4xf32>
    %cst_34 = arith.constant dense<0.000000e+00> : vector<40x4xf32>
    %35 = tpu.matmul %33, %34, %cst_34 {dimension_numbers = #tpu.dot_dimension_numbers<[1], [0], [0], [1], [0, 0, 1, 1], [], []>} : vector<40x128xf32>, vector<128x4xf32>, vector<40x4xf32> -> vector<40x4xf32>
    %c0_35 = arith.constant 0 : index
    %c0_36 = arith.constant 0 : index
    %36 = vector.load %arg10[%c0_35, %c0_36] : memref<40x4xf32, #tpu.memory_space<vmem>>, vector<40x4xf32>
    %37 = arith.mulf %36, %35 : vector<40x4xf32>
    %cst_37 = arith.constant dense<0.000000e+00> : vector<40xf32>
    %38 = vector.multi_reduction <add>, %37, %cst_37 [1] : vector<40x4xf32> to vector<40xf32>
    %39 = vector.shape_cast %38 : vector<40xf32> to vector<40x1xf32>
    %c0_38 = arith.constant 0 : index
    %c0_39 = arith.constant 0 : index
    %40 = vector.load %arg12[%c0_38, %c0_39] : memref<40x1xf32, #tpu.memory_space<vmem>>, vector<40x1xf32>
    tpu.vector_store %arg12[%c0_38, %c0_39], %39 {strides = array<i32>} : memref<40x1xf32, #tpu.memory_space<vmem>>, vector<40x1xf32>,
    return
  }
  func.func @transform_0(%arg0: i32) -> (i32, i32) {
    %c0_i32 = arith.constant 0 : i32
    %c0_i32_0 = arith.constant 0 : i32
    return %arg0, %c0_i32 : i32, i32
  }
  func.func @transform_1(%arg0: i32) -> (i32, i32) {
    %c0_i32 = arith.constant 0 : i32
    %c0_i32_0 = arith.constant 0 : i32
    return %arg0, %c0_i32 : i32, i32
  }
  func.func @transform_2(%arg0: i32) -> (i32, i32) {
    %c0_i32 = arith.constant 0 : i32
    %c0_i32_0 = arith.constant 0 : i32
    %c0_i32_1 = arith.constant 0 : i32
    return %c0_i32, %c0_i32_0 : i32, i32
  }
  func.func @transform_3(%arg0: i32) -> (i32, i32) {
    %c0_i32 = arith.constant 0 : i32
    %c0_i32_0 = arith.constant 0 : i32
    %c0_i32_1 = arith.constant 0 : i32
    return %c0_i32, %c0_i32_0 : i32, i32
  }
  func.func @transform_4(%arg0: i32) -> (i32, i32) {
    %c0_i32 = arith.constant 0 : i32
    %c0_i32_0 = arith.constant 0 : i32
    %c0_i32_1 = arith.constant 0 : i32
    return %c0_i32, %c0_i32_0 : i32, i32
  }
  func.func @transform_5(%arg0: i32) -> (i32, i32) {
    %c0_i32 = arith.constant 0 : i32
    %c0_i32_0 = arith.constant 0 : i32
    %c0_i32_1 = arith.constant 0 : i32
    return %c0_i32, %c0_i32_0 : i32, i32
  }
  func.func @transform_6(%arg0: i32) -> (i32, i32) {
    %c0_i32 = arith.constant 0 : i32
    %c0_i32_0 = arith.constant 0 : i32
    %c0_i32_1 = arith.constant 0 : i32
    return %c0_i32, %c0_i32_0 : i32, i32
  }
  func.func @transform_7(%arg0: i32) -> (i32, i32) {
    %c0_i32 = arith.constant 0 : i32
    %c0_i32_0 = arith.constant 0 : i32
    %c0_i32_1 = arith.constant 0 : i32
    return %c0_i32, %c0_i32_0 : i32, i32
  }
  func.func @transform_8(%arg0: i32) -> (i32, i32) {
    %c0_i32 = arith.constant 0 : i32
    %c0_i32_0 = arith.constant 0 : i32
    %c0_i32_1 = arith.constant 0 : i32
    return %c0_i32, %c0_i32_0 : i32, i32
  }
  func.func @transform_9(%arg0: i32) -> (i32, i32) {
    %c0_i32 = arith.constant 0 : i32
    %c0_i32_0 = arith.constant 0 : i32
    return %arg0, %c0_i32 : i32, i32
  }
  func.func @transform_10(%arg0: i32) -> (i32, i32) {
    %c0_i32 = arith.constant 0 : i32
    %c0_i32_0 = arith.constant 0 : i32
    %c0_i32_1 = arith.constant 0 : i32
    return %c0_i32, %c0_i32_0 : i32, i32
  }
  func.func @transform_11(%arg0: i32) -> (i32, i32) {
    %c0_i32 = arith.constant 0 : i32
    %c0_i32_0 = arith.constant 0 : i32
    return %arg0, %c0_i32 : i32, i32
  }
}

</mosaic_0001>

<llo_original>
// kernel: tpu_custom_call.1
$region0: #{tpu_custom_call.1}
  #allocation0 [shape = 'u32[]', space=smem, size = 0x4, offset = 0x4, fixed_abs, tag = 'smem constant byte address 0x4 - core index']
  #allocation1 [shape = 'u32[144,128]{1,0:T(1,128)}', space=vmem, size = 0x12000, scoped, tag = 'internal scratch']
  %s0 = inlined_call_operand.vmem [shape: f32[200,128], index: 0, kind: input, shape index: {}]
  %s1 = inlined_call_operand.hbm [shape: f32[200,128], index: 1, kind: input, shape index: {}]
  %s2 = inlined_call_operand.vmem [shape: f32[128,128], index: 2, kind: input, shape index: {}]
  %s3 = inlined_call_operand.vmem [shape: f32[1,128], index: 3, kind: input, shape index: {}]
  %s4 = inlined_call_operand.hbm [shape: f32[128,128], index: 4, kind: input, shape index: {}]
  %s5 = inlined_call_operand.vmem [shape: f32[1,128], index: 5, kind: input, shape index: {}]
  %s6 = inlined_call_operand.hbm [shape: f32[128,128], index: 6, kind: input, shape index: {}]
  %s7 = inlined_call_operand.hbm [shape: f32[128,128], index: 7, kind: input, shape index: {}]
  %s8 = inlined_call_operand.vmem [shape: f32[1,128], index: 8, kind: input, shape index: {}]
  %s9 = inlined_call_operand.vmem [shape: f32[200,4], index: 9, kind: input, shape index: {}]
  %s10 = inlined_call_operand.vmem [shape: f32[128,4], index: 10, kind: input, shape index: {}]
  %s11 = inlined_call_operand.vmem [shape: f32[200,1], index: 11, kind: output, shape index: {}]
  %s12 = sld [smem:[#allocation0]]
  $region93: #{tpu_custom_call.1} parent=0
    _
  %s14 = ssub.s32 1, %s12
  %s15 = scalar_select 0, %s14, %s12
  $region1: #{tpu_custom_call.1} parent=0
    #allocation2 [shape = 'u8[40960]{0}', space=vmem, size = 0xa000, scoped, tag = 'input window, operand 1']
    #allocation3 [shape = 's32[2]{0}', space=sflag, size = 0x8, scoped, tag = 'scoped memory for tpu_custom_call.1']
    #allocation4 [shape = 'u8[65536]{0}', space=vmem, size = 0x10000, scoped, tag = 'input window, operand 4, single buffered']
    #allocation5 [shape = 's32[1]{0}', space=sflag, size = 0x4, scoped, tag = 'scoped memory for tpu_custom_call.1']
    #allocation6 [shape = 'u8[65536]{0}', space=vmem, size = 0x10000, scoped, tag = 'input window, operand 6, single buffered']
    #allocation7 [shape = 'u8[65536]{0}', space=vmem, size = 0x10000, scoped, tag = 'input window, operand 7, single buffered']
    #allocation8 [shape = 's32[1]{0}', space=sflag, size = 0x4, scoped, tag = 'scoped memory for tpu_custom_call.1']
    %16 = vsyncpa [#allocation3], 0
    %s17 = scalar_lea.sflag [#allocation3], 1
    %18 = vsyncpa %s17, 0
    %19 = vsyncpa [#allocation5], 0
    %20 = vsyncpa [#allocation8], 0
    loop: start=0, step=1, limit=7
    $region2: #{tpu_custom_call.1} parent=1 // loop_pre_header
      _
    $region3: #{tpu_custom_call.1} parent=1 // loop_header
      %s22 = sphi 0, %s26
      %p23 = scmp.ge.s32.totalorder %s22, 7
      %s32 = sphi 0, %s34
      %s35 = sphi 0, %s32
      %s36 = sphi 0, %s35
      %s52 = sphi 0, %s36
      %s58 = sphi 0, %s60
      %s61 = sphi 0, %s58
      %s62 = sphi 0, %s61
      %s78 = sphi 0, %s62
      %s82 = sphi 0, %s82
      %s84 = sphi 0, %s82
      %s85 = sphi 0, %s84
      %s99 = sphi 0, %s85
      %s103 = sphi 0, %s103
      %s105 = sphi 0, %s103
      %s106 = sphi 0, %s105
      %s120 = sphi 0, %s106
      %s124 = sphi 0, %s124
      %s126 = sphi 0, %s124
      %s127 = sphi 0, %s126
      %s141 = sphi 0, %s127
      %s145 = sphi 0, %s145
      %s147 = sphi 0, %s145
      %s148 = sphi 0, %s147
      %s162 = sphi 0, %s148
      %s166 = sphi 0, %s166
      %s168 = sphi 0, %s166
      %s169 = sphi 0, %s168
      %s183 = sphi 0, %s169
      %s187 = sphi 0, %s187
      %s189 = sphi 0, %s187
      %s190 = sphi 0, %s189
      %s204 = sphi 0, %s190
      %s208 = sphi 0, %s208
      %s210 = sphi 0, %s208
      %s211 = sphi 0, %s210
      %s225 = sphi 0, %s211
      %s231 = sphi 0, %s233
      %s234 = sphi 0, %s231
      %s235 = sphi 0, %s234
      %s251 = sphi 0, %s235
      %s255 = sphi 0, %s255
      %s257 = sphi 0, %s255
      %s258 = sphi 0, %s257
      %s272 = sphi 0, %s258
      %s278 = sphi 0, %s280
      %s281 = sphi 0, %s278
      %s282 = sphi 0, %s281
      %s298 = sphi 0, %s282
    $region4: #{tpu_custom_call.1} parent=1 // loop_header_branch
      %25 = sbr.rel (%p23) target = $region8
    $region5: #{tpu_custom_call.1} parent=1 // loop_body
      %s27 = ssub.s32 %s22, 1
      %s28 = ssub.s32 %s22, 2
      %s29 = sadd.s32 %s22, 1
      %s30 = ssub.s32 %s22, %s29
      %p31 = scmp.eq.s32.totalorder %s30, 0
      %s33 = sadd.s32 %s32, 1
      %s34 = scalar_select %p31, %s32, %s33
      %p37 = pneg %p31
      %p38 = scmp.eq.s32.totalorder %s22, 4
      %p39 = por %p37, %p38
      %p40 = scmp.ne.s32.totalorder %s32, %s35
      %p41 = scmp.eq.s32.totalorder %s22, 0
      %p42 = por %p40, %p41
      %p43 = scmp.ne.s32.totalorder %s32, %s35
      %p44 = scmp.eq.s32.totalorder %s27, 4
      %p45 = por %p43, %p44
      %p46 = scmp.ne.s32.totalorder %s35, %s36
      %p47 = scmp.eq.s32.totalorder %s27, 0
      %p48 = por %p46, %p47
      %p49 = scmp.ne.s32.totalorder %s35, %s36
      %p50 = scmp.eq.s32.totalorder %s28, 4
      %p51 = por %p49, %p50
      %p53 = scmp.ne.s32.totalorder %s36, %s52
      %p54 = scmp.eq.s32.totalorder %s28, 0
      %p55 = por %p53, %p54
      %s56 = ssub.s32 %s22, %s29
      %p57 = scmp.eq.s32.totalorder %s56, 0
      %s59 = sadd.s32 %s58, 1
      %s60 = scalar_select %p57, %s58, %s59
      %p63 = pneg %p57
      %p64 = scmp.eq.s32.totalorder %s22, 4
      %p65 = por %p63, %p64
      %p66 = scmp.ne.s32.totalorder %s58, %s61
      %p67 = scmp.eq.s32.totalorder %s22, 0
      %p68 = por %p66, %p67
      %p69 = scmp.ne.s32.totalorder %s58, %s61
      %p70 = scmp.eq.s32.totalorder %s27, 4
      %p71 = por %p69, %p70
      %p72 = scmp.ne.s32.totalorder %s61, %s62
      %p73 = scmp.eq.s32.totalorder %s27, 0
      %p74 = por %p72, %p73
      %p75 = scmp.ne.s32.totalorder %s61, %s62
      %p76 = scmp.eq.s32.totalorder %s28, 4
      %p77 = por %p75, %p76
      %p79 = scmp.ne.s32.totalorder %s62, %s78
      %p80 = scmp.eq.s32.totalorder %s28, 0
      %p81 = por %p79, %p80
      %s83 = sadd.s32 %s82, 1
      %p86 = scmp.eq.s32.totalorder %s22, 4
      %p87 = scmp.ne.s32.totalorder %s82, %s84
      %p88 = scmp.eq.s32.totalorder %s22, 0
      %p89 = por %p87, %p88
      %p90 = scmp.ne.s32.totalorder %s82, %s84
      %p91 = scmp.eq.s32.totalorder %s27, 4
      %p92 = por %p90, %p91
      %p93 = scmp.ne.s32.totalorder %s84, %s85
      %p94 = scmp.eq.s32.totalorder %s27, 0
      %p95 = por %p93, %p94
      %p96 = scmp.ne.s32.totalorder %s84, %s85
      %p97 = scmp.eq.s32.totalorder %s28, 4
      %p98 = por %p96, %p97
      %p100 = scmp.ne.s32.totalorder %s85, %s99
      %p101 = scmp.eq.s32.totalorder %s28, 0
      %p102 = por %p100, %p101
      %s104 = sadd.s32 %s103, 1
      %p107 = scmp.eq.s32.totalorder %s22, 4
      %p108 = scmp.ne.s32.totalorder %s103, %s105
      %p109 = scmp.eq.s32.totalorder %s22, 0
      %p110 = por %p108, %p109
      %p111 = scmp.ne.s32.totalorder %s103, %s105
      %p112 = scmp.eq.s32.totalorder %s27, 4
      %p113 = por %p111, %p112
      %p114 = scmp.ne.s32.totalorder %s105, %s106
      %p115 = scmp.eq.s32.totalorder %s27, 0
      %p116 = por %p114, %p115
      %p117 = scmp.ne.s32.totalorder %s105, %s106
      %p118 = scmp.eq.s32.totalorder %s28, 4
      %p119 = por %p117, %p118
      %p121 = scmp.ne.s32.totalorder %s106, %s120
      %p122 = scmp.eq.s32.totalorder %s28, 0
      %p123 = por %p121, %p122
      %s125 = sadd.s32 %s124, 1
      %p128 = scmp.eq.s32.totalorder %s22, 4
      %p129 = scmp.ne.s32.totalorder %s124, %s126
      %p130 = scmp.eq.s32.totalorder %s22, 0
      %p131 = por %p129, %p130
      %p132 = scmp.ne.s32.totalorder %s124, %s126
      %p133 = scmp.eq.s32.totalorder %s27, 4
      %p134 = por %p132, %p133
      %p135 = scmp.ne.s32.totalorder %s126, %s127
      %p136 = scmp.eq.s32.totalorder %s27, 0
      %p137 = por %p135, %p136
      %p138 = scmp.ne.s32.totalorder %s126, %s127
      %p139 = scmp.eq.s32.totalorder %s28, 4
      %p140 = por %p138, %p139
      %p142 = scmp.ne.s32.totalorder %s127, %s141
      %p143 = scmp.eq.s32.totalorder %s28, 0
      %p144 = por %p142, %p143
      %s146 = sadd.s32 %s145, 1
      %p149 = scmp.eq.s32.totalorder %s22, 4
      %p150 = scmp.ne.s32.totalorder %s145, %s147
      %p151 = scmp.eq.s32.totalorder %s22, 0
      %p152 = por %p150, %p151
      %p153 = scmp.ne.s32.totalorder %s145, %s147
      %p154 = scmp.eq.s32.totalorder %s27, 4
      %p155 = por %p153, %p154
      %p156 = scmp.ne.s32.totalorder %s147, %s148
      %p157 = scmp.eq.s32.totalorder %s27, 0
      %p158 = por %p156, %p157
      %p159 = scmp.ne.s32.totalorder %s147, %s148
      %p160 = scmp.eq.s32.totalorder %s28, 4
      %p161 = por %p159, %p160
      %p163 = scmp.ne.s32.totalorder %s148, %s162
      %p164 = scmp.eq.s32.totalorder %s28, 0
      %p165 = por %p163, %p164
      %s167 = sadd.s32 %s166, 1
      %p170 = scmp.eq.s32.totalorder %s22, 4
      %p171 = scmp.ne.s32.totalorder %s166, %s168
      %p172 = scmp.eq.s32.totalorder %s22, 0
      %p173 = por %p171, %p172
      %p174 = scmp.ne.s32.totalorder %s166, %s168
      %p175 = scmp.eq.s32.totalorder %s27, 4
      %p176 = por %p174, %p175
      %p177 = scmp.ne.s32.totalorder %s168, %s169
      %p178 = scmp.eq.s32.totalorder %s27, 0
      %p179 = por %p177, %p178
      %p180 = scmp.ne.s32.totalorder %s168, %s169
      %p181 = scmp.eq.s32.totalorder %s28, 4
      %p182 = por %p180, %p181
      %p184 = scmp.ne.s32.totalorder %s169, %s183
      %p185 = scmp.eq.s32.totalorder %s28, 0
      %p186 = por %p184, %p185
      %s188 = sadd.s32 %s187, 1
      %p191 = scmp.eq.s32.totalorder %s22, 4
      %p192 = scmp.ne.s32.totalorder %s187, %s189
      %p193 = scmp.eq.s32.totalorder %s22, 0
      %p194 = por %p192, %p193
      %p195 = scmp.ne.s32.totalorder %s187, %s189
      %p196 = scmp.eq.s32.totalorder %s27, 4
      %p197 = por %p195, %p196
      %p198 = scmp.ne.s32.totalorder %s189, %s190
      %p199 = scmp.eq.s32.totalorder %s27, 0
      %p200 = por %p198, %p199
      %p201 = scmp.ne.s32.totalorder %s189, %s190
      %p202 = scmp.eq.s32.totalorder %s28, 4
      %p203 = por %p201, %p202
      %p205 = scmp.ne.s32.totalorder %s190, %s204
      %p206 = scmp.eq.s32.totalorder %s28, 0
      %p207 = por %p205, %p206
      %s209 = sadd.s32 %s208, 1
      %p212 = scmp.eq.s32.totalorder %s22, 4
      %p213 = scmp.ne.s32.totalorder %s208, %s210
      %p214 = scmp.eq.s32.totalorder %s22, 0
      %p215 = por %p213, %p214
      %p216 = scmp.ne.s32.totalorder %s208, %s210
      %p217 = scmp.eq.s32.totalorder %s27, 4
      %p218 = por %p216, %p217
      %p219 = scmp.ne.s32.totalorder %s210, %s211
      %p220 = scmp.eq.s32.totalorder %s27, 0
      %p221 = por %p219, %p220
      %p222 = scmp.ne.s32.totalorder %s210, %s211
      %p223 = scmp.eq.s32.totalorder %s28, 4
      %p224 = por %p222, %p223
      %p226 = scmp.ne.s32.totalorder %s211, %s225
      %p227 = scmp.eq.s32.totalorder %s28, 0
      %p228 = por %p226, %p227
      %s229 = ssub.s32 %s22, %s29
      %p230 = scmp.eq.s32.totalorder %s229, 0
      %s232 = sadd.s32 %s231, 1
      %s233 = scalar_select %p230, %s231, %s232
      %p236 = pneg %p230
      %p237 = scmp.eq.s32.totalorder %s22, 4
      %p238 = por %p236, %p237
      %p239 = scmp.ne.s32.totalorder %s231, %s234
      %p240 = scmp.eq.s32.totalorder %s22, 0
      %p241 = por %p239, %p240
      %p242 = scmp.ne.s32.totalorder %s231, %s234
      %p243 = scmp.eq.s32.totalorder %s27, 4
      %p244 = por %p242, %p243
      %p245 = scmp.ne.s32.totalorder %s234, %s235
      %p246 = scmp.eq.s32.totalorder %s27, 0
      %p247 = por %p245, %p246
      %p248 = scmp.ne.s32.totalorder %s234, %s235
      %p249 = scmp.eq.s32.totalorder %s28, 4
      %p250 = por %p248, %p249
      %p252 = scmp.ne.s32.totalorder %s235, %s251
      %p253 = scmp.eq.s32.totalorder %s28, 0
      %p254 = por %p252, %p253
      %s256 = sadd.s32 %s255, 1
      %p259 = scmp.eq.s32.totalorder %s22, 4
      %p260 = scmp.ne.s32.totalorder %s255, %s257
      %p261 = scmp.eq.s32.totalorder %s22, 0
      %p262 = por %p260, %p261
      %p263 = scmp.ne.s32.totalorder %s255, %s257
      %p264 = scmp.eq.s32.totalorder %s27, 4
      %p265 = por %p263, %p264
      %p266 = scmp.ne.s32.totalorder %s257, %s258
      %p267 = scmp.eq.s32.totalorder %s27, 0
      %p268 = por %p266, %p267
      %p269 = scmp.ne.s32.totalorder %s257, %s258
      %p270 = scmp.eq.s32.totalorder %s28, 4
      %p271 = por %p269, %p270
      %p273 = scmp.ne.s32.totalorder %s258, %s272
      %p274 = scmp.eq.s32.totalorder %s28, 0
      %p275 = por %p273, %p274
      %s276 = ssub.s32 %s22, %s29
      %p277 = scmp.eq.s32.totalorder %s276, 0
      %s279 = sadd.s32 %s278, 1
      %s280 = scalar_select %p277, %s278, %s279
      %p283 = pneg %p277
      %p284 = scmp.eq.s32.totalorder %s22, 4
      %p285 = por %p283, %p284
      %p286 = scmp.ne.s32.totalorder %s278, %s281
      %p287 = scmp.eq.s32.totalorder %s22, 0
      %p288 = por %p286, %p287
      %p289 = scmp.ne.s32.totalorder %s278, %s281
      %p290 = scmp.eq.s32.totalorder %s27, 4
      %p291 = por %p289, %p290
      %p292 = scmp.ne.s32.totalorder %s281, %s282
      %p293 = scmp.eq.s32.totalorder %s27, 0
      %p294 = por %p292, %p293
      %p295 = scmp.ne.s32.totalorder %s281, %s282
      %p296 = scmp.eq.s32.totalorder %s28, 4
      %p297 = por %p295, %p296
      %p299 = scmp.ne.s32.totalorder %s282, %s298
      %p300 = scmp.eq.s32.totalorder %s28, 0
      %p301 = por %p299, %p300
      %p302 = scmp.le.s32.totalorder 1, %s22
      %p303 = scmp.lt.s32.totalorder %s22, 6
      %p304 = pnand %p302, %p303
      %p305 = pneg %p304
      // Predicated region
      $region9: #{tpu_custom_call.1} parent=5 // pred_check
        _
      $region10: #{tpu_custom_call.1} parent=5 // pred_check_branch
        %307 = sbr.rel (%p304) target = $region12
      $region11: #{tpu_custom_call.1} parent=5 // pred_region
        %s308 = ssub.s32 %s22, 1
        // Predicated region
        $region13: #{tpu_custom_call.1} parent=11 // pred_check
          %p309 = pneg %p95
        $region14: #{tpu_custom_call.1} parent=11 // pred_check_branch
          %311 = sbr.rel (%p309) target = $region16
        $region15: #{tpu_custom_call.1} parent=11 // pred_region
          _
        $region16: #{tpu_custom_call.1} parent=11 // pred_fallthru
          _
        // Predicated region
        $region17: #{tpu_custom_call.1} parent=11 // pred_check
          %p312 = pneg %p116
        $region18: #{tpu_custom_call.1} parent=11 // pred_check_branch
          %314 = sbr.rel (%p312) target = $region20
        $region19: #{tpu_custom_call.1} parent=11 // pred_region
          _
        $region20: #{tpu_custom_call.1} parent=11 // pred_fallthru
          _
        // Predicated region
        $region21: #{tpu_custom_call.1} parent=11 // pred_check
          %p315 = pneg %p137
        $region22: #{tpu_custom_call.1} parent=11 // pred_check_branch
          %317 = sbr.rel (%p315) target = $region24
        $region23: #{tpu_custom_call.1} parent=11 // pred_region
          %s319 = ssub.s32 2048, 2048
          %320 = vsyncadd [#allocation5], %s319
          %s321 = sshll.u32 [#allocation4], 4
          %s322 = int_to_ptr.vmem [resolvable:$true] %s321
          %327 = dma.hbm_to_vmem [thread:$0]  %s4, 2048, %s322, [#allocation5], 128, 128, 8
        $region24: #{tpu_custom_call.1} parent=11 // pred_fallthru
          _
        // Predicated region
        $region25: #{tpu_custom_call.1} parent=11 // pred_check
          %p328 = pneg %p158
        $region26: #{tpu_custom_call.1} parent=11 // pred_check_branch
          %330 = sbr.rel (%p328) target = $region28
        $region27: #{tpu_custom_call.1} parent=11 // pred_region
          _
        $region28: #{tpu_custom_call.1} parent=11 // pred_fallthru
          _
        // Predicated region
        $region29: #{tpu_custom_call.1} parent=11 // pred_check
          %p331 = pneg %p179
        $region30: #{tpu_custom_call.1} parent=11 // pred_check_branch
          %333 = sbr.rel (%p331) target = $region32
        $region31: #{tpu_custom_call.1} parent=11 // pred_region
          %s335 = ssub.s32 2048, 2048
          %336 = vsyncadd [#allocation5], %s335
          %s337 = sshll.u32 [#allocation6], 4
          %s338 = int_to_ptr.vmem [resolvable:$true] %s337
          %343 = dma.hbm_to_vmem [thread:$0]  %s6, 2048, %s338, [#allocation5], 128, 128, 8
        $region32: #{tpu_custom_call.1} parent=11 // pred_fallthru
          _
        // Predicated region
        $region33: #{tpu_custom_call.1} parent=11 // pred_check
          %p344 = pneg %p200
        $region34: #{tpu_custom_call.1} parent=11 // pred_check_branch
          %346 = sbr.rel (%p344) target = $region36
        $region35: #{tpu_custom_call.1} parent=11 // pred_region
          %s348 = ssub.s32 2048, 2048
          %349 = vsyncadd [#allocation8], %s348
          %s350 = sshll.u32 [#allocation7], 4
          %s351 = int_to_ptr.vmem [resolvable:$true] %s350
          %356 = dma.hbm_to_vmem [thread:$0]  %s7, 2048, %s351, [#allocation8], 128, 128, 8
        $region36: #{tpu_custom_call.1} parent=11 // pred_fallthru
          _
        // Predicated region
        $region37: #{tpu_custom_call.1} parent=11 // pred_check
          %p357 = pneg %p221
        $region38: #{tpu_custom_call.1} parent=11 // pred_check_branch
          %359 = sbr.rel (%p357) target = $region40
        $region39: #{tpu_custom_call.1} parent=11 // pred_region
          _
        $region40: #{tpu_custom_call.1} parent=11 // pred_fallthru
          _
        // Predicated region
        $region41: #{tpu_custom_call.1} parent=11 // pred_check
          %p360 = pneg %p268
        $region42: #{tpu_custom_call.1} parent=11 // pred_check_branch
          %362 = sbr.rel (%p360) target = $region44
        $region43: #{tpu_custom_call.1} parent=11 // pred_region
          _
        $region44: #{tpu_custom_call.1} parent=11 // pred_fallthru
          _
      $region12: #{tpu_custom_call.1} parent=5 // pred_fallthru
        _
      %p363 = scmp.lt.s32.totalorder %s22, 5
      // Predicated region
      $region45: #{tpu_custom_call.1} parent=5 // pred_check
        %p364 = pneg %p363
      $region46: #{tpu_custom_call.1} parent=5 // pred_check_branch
        %366 = sbr.rel (%p364) target = $region48
      $region47: #{tpu_custom_call.1} parent=5 // pred_region
        // Predicated region
        $region49: #{tpu_custom_call.1} parent=47 // pred_check
          %p367 = pneg %p42
        $region50: #{tpu_custom_call.1} parent=47 // pred_check_branch
          %369 = sbr.rel (%p367) target = $region52
        $region51: #{tpu_custom_call.1} parent=47 // pred_region
          %s370 = smul.u32 5, %s22
          %p371 = scmp.lt.s32.totalorder %s370, 24
          %s372 = scalar_select %p371, %s370, 24
          %s373 = smul.addr %s372, 8
          %s374 = scalar_lea.vmem %s0, %s373
          %s375 = smul.u32 5, %s22
        $region52: #{tpu_custom_call.1} parent=47 // pred_fallthru
          _
        // Predicated region
        $region53: #{tpu_custom_call.1} parent=47 // pred_check
          %p376 = pneg %p68
        $region54: #{tpu_custom_call.1} parent=47 // pred_check_branch
          %378 = sbr.rel (%p376) target = $region56
        $region55: #{tpu_custom_call.1} parent=47 // pred_region
          %s379 = sand.u32 %s58, 1
          %s380 = scalar_lea.sflag [#allocation3], %s379
          %s381 = sand.u32 %s58, 1
          %s382 = smul.addr %s381, 40
          %s383 = scalar_lea.vmem [#allocation2], %s382
          %s384 = smul.u32 5, %s22
          %s386 = ssub.s32 640, 640
          %387 = vsyncadd %s380, %s386
          %s388 = smul.addr %s384, 128
          %s389 = scalar_lea.hbm %s1, %s388
          %s390 = sshll.u32 %s383, 4
          %s391 = int_to_ptr.vmem [resolvable:$true] %s390
          %396 = dma.hbm_to_vmem [thread:$0]  %s389, 640, %s391, %s380, 128, 128, 8
        $region56: #{tpu_custom_call.1} parent=47 // pred_fallthru
          _
        // Predicated region
        $region57: #{tpu_custom_call.1} parent=47 // pred_check
          %p397 = pneg %p241
        $region58: #{tpu_custom_call.1} parent=47 // pred_check_branch
          %399 = sbr.rel (%p397) target = $region60
        $region59: #{tpu_custom_call.1} parent=47 // pred_region
          %s400 = smul.u32 5, %s22
          %p401 = scmp.lt.s32.totalorder %s400, 24
          %s402 = scalar_select %p401, %s400, 24
          %s403 = smul.addr %s402, 8
          %s404 = scalar_lea.vmem %s9, %s403
          %s405 = smul.u32 5, %s22
        $region60: #{tpu_custom_call.1} parent=47 // pred_fallthru
          _
      $region48: #{tpu_custom_call.1} parent=5 // pred_fallthru
        _
      %p406 = scmp.le.s32.totalorder 1, %s22
      %p407 = scmp.lt.s32.totalorder %s22, 6
      %p408 = pnand %p406, %p407
      %p409 = pneg %p408
      // Predicated region
      $region61: #{tpu_custom_call.1} parent=5 // pred_check
        _
      $region62: #{tpu_custom_call.1} parent=5 // pred_check_branch
        %411 = sbr.rel (%p408) target = $region64
      $region63: #{tpu_custom_call.1} parent=5 // pred_region
        %s412 = ssub.s32 %s22, 1
        %s413 = sand.u32 %s61, 1
        %s414 = scalar_lea.sflag [#allocation3], %s413
        %s415 = sand.u32 %s61, 1
        %s416 = smul.addr %s415, 40
        %s417 = scalar_lea.vmem [#allocation2], %s416
        // Predicated region
        $region65: #{tpu_custom_call.1} parent=63 // pred_check
          %p418 = pneg %p74
        $region66: #{tpu_custom_call.1} parent=63 // pred_check_branch
          %420 = sbr.rel (%p418) target = $region68
        $region67: #{tpu_custom_call.1} parent=63 // pred_region
          %421 = dma.done %s414, 640
        $region68: #{tpu_custom_call.1} parent=63 // pred_fallthru
          _
        // Predicated region
        $region69: #{tpu_custom_call.1} parent=63 // pred_check
          %p422 = pneg %p137
        $region70: #{tpu_custom_call.1} parent=63 // pred_check_branch
          %424 = sbr.rel (%p422) target = $region72
        $region71: #{tpu_custom_call.1} parent=63 // pred_region
          %425 = dma.done [#allocation5], 2048
        $region72: #{tpu_custom_call.1} parent=63 // pred_fallthru
          _
        // Predicated region
        $region73: #{tpu_custom_call.1} parent=63 // pred_check
          %p426 = pneg %p179
        $region74: #{tpu_custom_call.1} parent=63 // pred_check_branch
          %428 = sbr.rel (%p426) target = $region76
        $region75: #{tpu_custom_call.1} parent=63 // pred_region
          %429 = dma.done [#allocation5], 2048
        $region76: #{tpu_custom_call.1} parent=63 // pred_fallthru
          _
        // Predicated region
        $region77: #{tpu_custom_call.1} parent=63 // pred_check
          %p430 = pneg %p200
        $region78: #{tpu_custom_call.1} parent=63 // pred_check_branch
          %432 = sbr.rel (%p430) target = $region80
        $region79: #{tpu_custom_call.1} parent=63 // pred_region
          %433 = dma.done [#allocation8], 2048
        $region80: #{tpu_custom_call.1} parent=63 // pred_fallthru
          _
        %s434 = smul.u32 5, %s27
        %p435 = scmp.lt.s32.totalorder %s434, 24
        %s436 = scalar_select %p435, %s434, 24
        %s437 = smul.addr %s436, 8
        %s438 = scalar_lea.vmem %s0, %s437
        %p439 = pneg %p48
        %p440 = pneg %p45
        %s441 = sand.u32 %s61, 1
        %s442 = scalar_lea.sflag [#allocation3], %s441
        %s443 = sand.u32 %s61, 1
        %s444 = smul.addr %s443, 40
        %s445 = scalar_lea.vmem [#allocation2], %s444
        %p446 = pneg %p74
        %p447 = pneg %p71
        %p448 = pneg %p95
        %p449 = pneg %p92
        %p450 = pneg %p116
        %p451 = pneg %p113
        %p452 = pneg %p137
        %p453 = pneg %p134
        %p454 = pneg %p158
        %p455 = pneg %p155
        %p456 = pneg %p179
        %p457 = pneg %p176
        %p458 = pneg %p200
        %p459 = pneg %p197
        %p460 = pneg %p221
        %p461 = pneg %p218
        %s462 = smul.u32 5, %s27
        %p463 = scmp.lt.s32.totalorder %s462, 24
        %s464 = scalar_select %p463, %s462, 24
        %s465 = smul.addr %s464, 8
        %s466 = scalar_lea.vmem %s9, %s465
        %p467 = pneg %p247
        %p468 = pneg %p244
        %p469 = pneg %p268
        %p470 = pneg %p265
        %p471 = pneg %p294
        %p472 = pneg %p291
        %s473 = smul.u32 5, %s27
        %p474 = scmp.lt.s32.totalorder %s473, 24
        %s475 = scalar_select %p474, %s473, 24
        %s476 = smul.addr %s475, 8
        %s477 = scalar_lea.vmem %s11, %s476
        %s478 = smul.u32 5, %s27
        %p479 = scmp.lt.s32.totalorder %s478, 24
        %s480 = scalar_select %p479, %s478, 24
        %s481 = smul.addr %s480, 8
        %s482 = scalar_lea.vmem %s0, %s481
        %s483 = smul.u32 5, %s27
        %s484 = smul.u32 5, %s27
        %s485 = smul.u32 5, %s27
        %p486 = scmp.lt.s32.totalorder %s485, 24
        %s487 = scalar_select %p486, %s485, 24
        %s488 = smul.addr %s487, 8
        %s489 = scalar_lea.vmem %s9, %s488
        %s490 = smul.u32 5, %s27
        %s491 = smul.u32 5, %s27
        %p492 = scmp.lt.s32.totalorder %s491, 24
        %s493 = scalar_select %p492, %s491, 24
        %s494 = smul.addr %s493, 8
        %s495 = scalar_lea.vmem %s11, %s494
        %s496 = smul.u32 5, %s27
        %v497 = vld [vmem:[%s482] sm:$0xff]
        %v498 = vld [vmem:[%s482 + $0x8] sm:$0xff]
        %v499 = vld [vmem:[%s482 + $0x10] sm:$0xff]
        %v500 = vld [vmem:[%s482 + $0x18] sm:$0xff]
        %v501 = vld [vmem:[%s482 + $0x20] sm:$0xff]
        %v502 = vld [vmem:[%s2] sm:$0xff]
        %v503 = vld [vmem:[%s2 + $0x8] sm:$0xff]
        %v504 = vld [vmem:[%s2 + $0x10] sm:$0xff]
        %v505 = vld [vmem:[%s2 + $0x18] sm:$0xff]
        %v506 = vld [vmem:[%s2 + $0x20] sm:$0xff]
        %v507 = vld [vmem:[%s2 + $0x28] sm:$0xff]
        %v508 = vld [vmem:[%s2 + $0x30] sm:$0xff]
        %v509 = vld [vmem:[%s2 + $0x38] sm:$0xff]
        %v510 = vld [vmem:[%s2 + $0x40] sm:$0xff]
        %v511 = vld [vmem:[%s2 + $0x48] sm:$0xff]
        %v512 = vld [vmem:[%s2 + $0x50] sm:$0xff]
        %v513 = vld [vmem:[%s2 + $0x58] sm:$0xff]
        %v514 = vld [vmem:[%s2 + $0x60] sm:$0xff]
        %v515 = vld [vmem:[%s2 + $0x68] sm:$0xff]
        %v516 = vld [vmem:[%s2 + $0x70] sm:$0xff]
        %v517 = vld [vmem:[%s2 + $0x78] sm:$0xff]
        %v518 = vld [vmem:[%s3] sm:$0x1]
        %v520 = vlaneseq
        %v521 = vshrl.u32 %v520, 7
        %v522 = vsub.s32 0, %v521
        %v523 = vrot.slane %v518, %v522
        %525 = vmatprep.subr.mxu0 0.0
        %526 = vmatpush1.msra.mxu0 %v502
        %527 = vmatprep.subr.mxu0 0.0
        %528 = vmatpush1.msra.mxu0 %v503
        %529 = vmatprep.subr.mxu0 0.0
        %530 = vmatpush1.msra.mxu0 %v504
        %531 = vmatprep.subr.mxu0 0.0
        %532 = vmatpush1.msra.mxu0 %v505
        %533 = vmatprep.subr.mxu0 0.0
        %534 = vmatpush1.msra.mxu0 %v506
        %535 = vmatprep.subr.mxu0 0.0
        %536 = vmatpush1.msra.mxu0 %v507
        %537 = vmatprep.subr.mxu0 0.0
        %538 = vmatpush1.msra.mxu0 %v508
        %539 = vmatprep.subr.mxu0 0.0
        %540 = vmatpush1.msra.mxu0 %v509
        %541 = vmatprep.subr.mxu0 0.0
        %542 = vmatpush1.msra.mxu0 %v510
        %543 = vmatprep.subr.mxu0 0.0
        %544 = vmatpush1.msra.mxu0 %v511
        %545 = vmatprep.subr.mxu0 0.0
        %546 = vmatpush1.msra.mxu0 %v512
        %547 = vmatprep.subr.mxu0 0.0
        %548 = vmatpush1.msra.mxu0 %v513
        %549 = vmatprep.subr.mxu0 0.0
        %550 = vmatpush1.msra.mxu0 %v514
        %551 = vmatprep.subr.mxu0 0.0
        %552 = vmatpush1.msra.mxu0 %v515
        %553 = vmatprep.subr.mxu0 0.0
        %554 = vmatpush1.msra.mxu0 %v516
        %555 = vmatprep.subr.mxu0 0.0
        %556 = vmatpush1.msra.mxu0 %v517
        %557 = vmatprep.subr.mxu0 0.0
        %558 = vmatpush1.msra.mxu0 0.0
        %559 = vmatprep.subr.mxu0 0.0
        %560 = vmatpush1.msra.mxu0 0.0
        %561 = vmatprep.subr.mxu0 0.0
        %562 = vmatpush1.msra.mxu0 0.0
        %563 = vmatprep.subr.mxu0 0.0
        %564 = vmatpush1.msra.mxu0 0.0
        %565 = vmatprep.subr.mxu0 0.0
        %566 = vmatpush1.msra.mxu0 0.0
        %567 = vmatprep.subr.mxu0 0.0
        %568 = vmatpush1.msra.mxu0 0.0
        %569 = vmatprep.subr.mxu0 0.0
        %570 = vmatpush1.msra.mxu0 0.0
        %571 = vmatprep.subr.mxu0 0.0
        %572 = vmatpush1.msra.mxu0 0.0
        %573 = vmatprep.subr.mxu0 0.0
        %574 = vmatpush1.msra.mxu0 0.0
        %575 = vmatprep.subr.mxu0 0.0
        %576 = vmatpush1.msra.mxu0 0.0
        %577 = vmatprep.subr.mxu0 0.0
        %578 = vmatpush1.msra.mxu0 0.0
        %579 = vmatprep.subr.mxu0 0.0
        %580 = vmatpush1.msra.mxu0 0.0
        %581 = vmatprep.subr.mxu0 0.0
        %582 = vmatpush1.msra.mxu0 0.0
        %583 = vmatprep.subr.mxu0 0.0
        %584 = vmatpush1.msra.mxu0 0.0
        %585 = vmatprep.subr.mxu0 0.0
        %586 = vmatpush1.msra.mxu0 0.0
        %587 = vmatprep.subr.mxu0 0.0
        %588 = vmatpush1.msra.mxu0 0.0
        %589 = vmatprep.mubr.f32.mxu0 0.0
        %590 = vmatmul.mubr.f32.gmra.mrb[0].mxu0 %v497
        %v591 = vpop.f32.mrb[0].mxu0
        %v592 = vadd.f32 %v523, %v591
        %v593 = vpop.f32.mrb[0].mxu0
        %594 = vmatprep.mubr.f32.mxu0 0.0
        %595 = vmatmul.mubr.f32.gmra.mrb[0].mxu0 %v498
        %v596 = vpop.f32.mrb[0].mxu0
        %v597 = vadd.f32 %v523, %v596
        %v598 = vpop.f32.mrb[0].mxu0
        %599 = vmatprep.mubr.f32.mxu0 0.0
        %600 = vmatmul.mubr.f32.gmra.mrb[0].mxu0 %v499
        %v601 = vpop.f32.mrb[0].mxu0
        %v602 = vadd.f32 %v523, %v601
        %v603 = vpop.f32.mrb[0].mxu0
        %604 = vmatprep.mubr.f32.mxu0 0.0
        %605 = vmatmul.mubr.f32.gmra.mrb[0].mxu0 %v500
        %v606 = vpop.f32.mrb[0].mxu0
        %v607 = vadd.f32 %v523, %v606
        %v608 = vpop.f32.mrb[0].mxu0
        %609 = vmatprep.mubr.f32.mxu0 0.0
        %610 = vmatmul.mubr.f32.gmra.mrb[0].mxu0 %v501
        %v611 = vpop.f32.mrb[0].mxu0
        %v612 = vadd.f32 %v523, %v611
        %v613 = vpop.f32.mrb[0].mxu0
        %614 = vdwg.mxu0
        %v615 = vmax.f32 %v592, 0.0
        %v616 = vmax.f32 %v597, 0.0
        %v617 = vmax.f32 %v602, 0.0
        %v618 = vmax.f32 %v607, 0.0
        %v619 = vmax.f32 %v612, 0.0
        %v620 = vld [vmem:[#allocation4] sm:$0xff]
        %v621 = vld [vmem:[#allocation4 + $0x8] sm:$0xff]
        %v622 = vld [vmem:[#allocation4 + $0x10] sm:$0xff]
        %v623 = vld [vmem:[#allocation4 + $0x18] sm:$0xff]
        %v624 = vld [vmem:[#allocation4 + $0x20] sm:$0xff]
        %v625 = vld [vmem:[#allocation4 + $0x28] sm:$0xff]
        %v626 = vld [vmem:[#allocation4 + $0x30] sm:$0xff]
        %v627 = vld [vmem:[#allocation4 + $0x38] sm:$0xff]
        %v628 = vld [vmem:[#allocation4 + $0x40] sm:$0xff]
        %v629 = vld [vmem:[#allocation4 + $0x48] sm:$0xff]
        %v630 = vld [vmem:[#allocation4 + $0x50] sm:$0xff]
        %v631 = vld [vmem:[#allocation4 + $0x58] sm:$0xff]
        %v632 = vld [vmem:[#allocation4 + $0x60] sm:$0xff]
        %v633 = vld [vmem:[#allocation4 + $0x68] sm:$0xff]
        %v634 = vld [vmem:[#allocation4 + $0x70] sm:$0xff]
        %v635 = vld [vmem:[#allocation4 + $0x78] sm:$0xff]
        %v636 = vld [vmem:[%s5] sm:$0x1]
        %v638 = vlaneseq
        %v639 = vshrl.u32 %v638, 7
        %v640 = vsub.s32 0, %v639
        %v641 = vrot.slane %v636, %v640
        %643 = vmatprep.subr.mxu0 0.0
        %644 = vmatpush1.msra.mxu0 %v620
        %645 = vmatprep.subr.mxu0 0.0
        %646 = vmatpush1.msra.mxu0 %v621
        %647 = vmatprep.subr.mxu0 0.0
        %648 = vmatpush1.msra.mxu0 %v622
        %649 = vmatprep.subr.mxu0 0.0
        %650 = vmatpush1.msra.mxu0 %v623
        %651 = vmatprep.subr.mxu0 0.0
        %652 = vmatpush1.msra.mxu0 %v624
        %653 = vmatprep.subr.mxu0 0.0
        %654 = vmatpush1.msra.mxu0 %v625
        %655 = vmatprep.subr.mxu0 0.0
        %656 = vmatpush1.msra.mxu0 %v626
        %657 = vmatprep.subr.mxu0 0.0
        %658 = vmatpush1.msra.mxu0 %v627
        %659 = vmatprep.subr.mxu0 0.0
        %660 = vmatpush1.msra.mxu0 %v628
        %661 = vmatprep.subr.mxu0 0.0
        %662 = vmatpush1.msra.mxu0 %v629
        %663 = vmatprep.subr.mxu0 0.0
        %664 = vmatpush1.msra.mxu0 %v630
        %665 = vmatprep.subr.mxu0 0.0
        %666 = vmatpush1.msra.mxu0 %v631
        %667 = vmatprep.subr.mxu0 0.0
        %668 = vmatpush1.msra.mxu0 %v632
        %669 = vmatprep.subr.mxu0 0.0
        %670 = vmatpush1.msra.mxu0 %v633
        %671 = vmatprep.subr.mxu0 0.0
        %672 = vmatpush1.msra.mxu0 %v634
        %673 = vmatprep.subr.mxu0 0.0
        %674 = vmatpush1.msra.mxu0 %v635
        %675 = vmatprep.subr.mxu0 0.0
        %676 = vmatpush1.msra.mxu0 0.0
        %677 = vmatprep.subr.mxu0 0.0
        %678 = vmatpush1.msra.mxu0 0.0
        %679 = vmatprep.subr.mxu0 0.0
        %680 = vmatpush1.msra.mxu0 0.0
        %681 = vmatprep.subr.mxu0 0.0
        %682 = vmatpush1.msra.mxu0 0.0
        %683 = vmatprep.subr.mxu0 0.0
        %684 = vmatpush1.msra.mxu0 0.0
        %685 = vmatprep.subr.mxu0 0.0
        %686 = vmatpush1.msra.mxu0 0.0
        %687 = vmatprep.subr.mxu0 0.0
        %688 = vmatpush1.msra.mxu0 0.0
        %689 = vmatprep.subr.mxu0 0.0
        %690 = vmatpush1.msra.mxu0 0.0
        %691 = vmatprep.subr.mxu0 0.0
        %692 = vmatpush1.msra.mxu0 0.0
        %693 = vmatprep.subr.mxu0 0.0
        %694 = vmatpush1.msra.mxu0 0.0
        %695 = vmatprep.subr.mxu0 0.0
        %696 = vmatpush1.msra.mxu0 0.0
        %697 = vmatprep.subr.mxu0 0.0
        %698 = vmatpush1.msra.mxu0 0.0
        %699 = vmatprep.subr.mxu0 0.0
        %700 = vmatpush1.msra.mxu0 0.0
        %701 = vmatprep.subr.mxu0 0.0
        %702 = vmatpush1.msra.mxu0 0.0
        %703 = vmatprep.subr.mxu0 0.0
        %704 = vmatpush1.msra.mxu0 0.0
        %705 = vmatprep.subr.mxu0 0.0
        %706 = vmatpush1.msra.mxu0 0.0
        %707 = vmatprep.mubr.f32.mxu0 0.0
        %708 = vmatmul.mubr.f32.gmra.mrb[0].mxu0 %v615
        %v709 = vpop.f32.mrb[0].mxu0
        %v710 = vadd.f32 %v641, %v709
        %v711 = vpop.f32.mrb[0].mxu0
        %712 = vmatprep.mubr.f32.mxu0 0.0
        %713 = vmatmul.mubr.f32.gmra.mrb[0].mxu0 %v616
        %v714 = vpop.f32.mrb[0].mxu0
        %v715 = vadd.f32 %v641, %v714
        %v716 = vpop.f32.mrb[0].mxu0
        %717 = vmatprep.mubr.f32.mxu0 0.0
        %718 = vmatmul.mubr.f32.gmra.mrb[0].mxu0 %v617
        %v719 = vpop.f32.mrb[0].mxu0
        %v720 = vadd.f32 %v641, %v719
        %v721 = vpop.f32.mrb[0].mxu0
        %722 = vmatprep.mubr.f32.mxu0 0.0
        %723 = vmatmul.mubr.f32.gmra.mrb[0].mxu0 %v618
        %v724 = vpop.f32.mrb[0].mxu0
        %v725 = vadd.f32 %v641, %v724
        %v726 = vpop.f32.mrb[0].mxu0
        %727 = vmatprep.mubr.f32.mxu0 0.0
        %728 = vmatmul.mubr.f32.gmra.mrb[0].mxu0 %v619
        %v729 = vpop.f32.mrb[0].mxu0
        %v730 = vadd.f32 %v641, %v729
        %v731 = vpop.f32.mrb[0].mxu0
        %732 = vdwg.mxu0
        %v733 = vld [vmem:[%s417] sm:$0xff]
        %v734 = vld [vmem:[%s417 + $0x8] sm:$0xff]
        %v735 = vld [vmem:[%s417 + $0x10] sm:$0xff]
        %v736 = vld [vmem:[%s417 + $0x18] sm:$0xff]
        %v737 = vld [vmem:[%s417 + $0x20] sm:$0xff]
        %738 = vmatprep.subr.mxu0 0.0
        %739 = vmatpush1.msra.mxu0 %v502
        %740 = vmatprep.subr.mxu0 0.0
        %741 = vmatpush1.msra.mxu0 %v503
        %742 = vmatprep.subr.mxu0 0.0
        %743 = vmatpush1.msra.mxu0 %v504
        %744 = vmatprep.subr.mxu0 0.0
        %745 = vmatpush1.msra.mxu0 %v505
        %746 = vmatprep.subr.mxu0 0.0
        %747 = vmatpush1.msra.mxu0 %v506
        %748 = vmatprep.subr.mxu0 0.0
        %749 = vmatpush1.msra.mxu0 %v507
        %750 = vmatprep.subr.mxu0 0.0
        %751 = vmatpush1.msra.mxu0 %v508
        %752 = vmatprep.subr.mxu0 0.0
        %753 = vmatpush1.msra.mxu0 %v509
        %754 = vmatprep.subr.mxu0 0.0
        %755 = vmatpush1.msra.mxu0 %v510
        %756 = vmatprep.subr.mxu0 0.0
        %757 = vmatpush1.msra.mxu0 %v511
        %758 = vmatprep.subr.mxu0 0.0
        %759 = vmatpush1.msra.mxu0 %v512
        %760 = vmatprep.subr.mxu0 0.0
        %761 = vmatpush1.msra.mxu0 %v513
        %762 = vmatprep.subr.mxu0 0.0
        %763 = vmatpush1.msra.mxu0 %v514
        %764 = vmatprep.subr.mxu0 0.0
        %765 = vmatpush1.msra.mxu0 %v515
        %766 = vmatprep.subr.mxu0 0.0
        %767 = vmatpush1.msra.mxu0 %v516
        %768 = vmatprep.subr.mxu0 0.0
        %769 = vmatpush1.msra.mxu0 %v517
        %770 = vmatprep.subr.mxu0 0.0
        %771 = vmatpush1.msra.mxu0 0.0
        %772 = vmatprep.subr.mxu0 0.0
        %773 = vmatpush1.msra.mxu0 0.0
        %774 = vmatprep.subr.mxu0 0.0
        %775 = vmatpush1.msra.mxu0 0.0
        %776 = vmatprep.subr.mxu0 0.0
        %777 = vmatpush1.msra.mxu0 0.0
        %778 = vmatprep.subr.mxu0 0.0
        %779 = vmatpush1.msra.mxu0 0.0
        %780 = vmatprep.subr.mxu0 0.0
        %781 = vmatpush1.msra.mxu0 0.0
        %782 = vmatprep.subr.mxu0 0.0
        %783 = vmatpush1.msra.mxu0 0.0
        %784 = vmatprep.subr.mxu0 0.0
        %785 = vmatpush1.msra.mxu0 0.0
        %786 = vmatprep.subr.mxu0 0.0
        %787 = vmatpush1.msra.mxu0 0.0
        %788 = vmatprep.subr.mxu0 0.0
        %789 = vmatpush1.msra.mxu0 0.0
        %790 = vmatprep.subr.mxu0 0.0
        %791 = vmatpush1.msra.mxu0 0.0
        %792 = vmatprep.subr.mxu0 0.0
        %793 = vmatpush1.msra.mxu0 0.0
        %794 = vmatprep.subr.mxu0 0.0
        %795 = vmatpush1.msra.mxu0 0.0
        %796 = vmatprep.subr.mxu0 0.0
        %797 = vmatpush1.msra.mxu0 0.0
        %798 = vmatprep.subr.mxu0 0.0
        %799 = vmatpush1.msra.mxu0 0.0
        %800 = vmatprep.subr.mxu0 0.0
        %801 = vmatpush1.msra.mxu0 0.0
        %802 = vmatprep.mubr.f32.mxu0 0.0
        %803 = vmatmul.mubr.f32.gmra.mrb[0].mxu0 %v733
        %v804 = vpop.f32.mrb[0].mxu0
        %v805 = vadd.f32 %v523, %v804
        %v806 = vpop.f32.mrb[0].mxu0
        %807 = vmatprep.mubr.f32.mxu0 0.0
        %808 = vmatmul.mubr.f32.gmra.mrb[0].mxu0 %v734
        %v809 = vpop.f32.mrb[0].mxu0
        %v810 = vadd.f32 %v523, %v809
        %v811 = vpop.f32.mrb[0].mxu0
        %812 = vmatprep.mubr.f32.mxu0 0.0
        %813 = vmatmul.mubr.f32.gmra.mrb[0].mxu0 %v735
        %v814 = vpop.f32.mrb[0].mxu0
        %v815 = vadd.f32 %v523, %v814
        %v816 = vpop.f32.mrb[0].mxu0
        %817 = vmatprep.mubr.f32.mxu0 0.0
        %818 = vmatmul.mubr.f32.gmra.mrb[0].mxu0 %v736
        %v819 = vpop.f32.mrb[0].mxu0
        %v820 = vadd.f32 %v523, %v819
        %v821 = vpop.f32.mrb[0].mxu0
        %822 = vmatprep.mubr.f32.mxu0 0.0
        %823 = vmatmul.mubr.f32.gmra.mrb[0].mxu0 %v737
        %v824 = vpop.f32.mrb[0].mxu0
        %v825 = vadd.f32 %v523, %v824
        %v826 = vpop.f32.mrb[0].mxu0
        %827 = vdwg.mxu0
        %v828 = vmax.f32 %v805, 0.0
        %v829 = vmax.f32 %v810, 0.0
        %v830 = vmax.f32 %v815, 0.0
        %v831 = vmax.f32 %v820, 0.0
        %v832 = vmax.f32 %v825, 0.0
        %833 = vmatprep.subr.mxu0 0.0
        %834 = vmatpush1.msra.mxu0 %v620
        %835 = vmatprep.subr.mxu0 0.0
        %836 = vmatpush1.msra.mxu0 %v621
        %837 = vmatprep.subr.mxu0 0.0
        %838 = vmatpush1.msra.mxu0 %v622
        %839 = vmatprep.subr.mxu0 0.0
        %840 = vmatpush1.msra.mxu0 %v623
        %841 = vmatprep.subr.mxu0 0.0
        %842 = vmatpush1.msra.mxu0 %v624
        %843 = vmatprep.subr.mxu0 0.0
        %844 = vmatpush1.msra.mxu0 %v625
        %845 = vmatprep.subr.mxu0 0.0
        %846 = vmatpush1.msra.mxu0 %v626
        %847 = vmatprep.subr.mxu0 0.0
        %848 = vmatpush1.msra.mxu0 %v627
        %849 = vmatprep.subr.mxu0 0.0
        %850 = vmatpush1.msra.mxu0 %v628
        %851 = vmatprep.subr.mxu0 0.0
        %852 = vmatpush1.msra.mxu0 %v629
        %853 = vmatprep.subr.mxu0 0.0
        %854 = vmatpush1.msra.mxu0 %v630
        %855 = vmatprep.subr.mxu0 0.0
        %856 = vmatpush1.msra.mxu0 %v631
        %857 = vmatprep.subr.mxu0 0.0
        %858 = vmatpush1.msra.mxu0 %v632
        %859 = vmatprep.subr.mxu0 0.0
        %860 = vmatpush1.msra.mxu0 %v633
        %861 = vmatprep.subr.mxu0 0.0
        %862 = vmatpush1.msra.mxu0 %v634
        %863 = vmatprep.subr.mxu0 0.0
        %864 = vmatpush1.msra.mxu0 %v635
        %865 = vmatprep.subr.mxu0 0.0
        %866 = vmatpush1.msra.mxu0 0.0
        %867 = vmatprep.subr.mxu0 0.0
        %868 = vmatpush1.msra.mxu0 0.0
        %869 = vmatprep.subr.mxu0 0.0
        %870 = vmatpush1.msra.mxu0 0.0
        %871 = vmatprep.subr.mxu0 0.0
        %872 = vmatpush1.msra.mxu0 0.0
        %873 = vmatprep.subr.mxu0 0.0
        %874 = vmatpush1.msra.mxu0 0.0
        %875 = vmatprep.subr.mxu0 0.0
        %876 = vmatpush1.msra.mxu0 0.0
        %877 = vmatprep.subr.mxu0 0.0
        %878 = vmatpush1.msra.mxu0 0.0
        %879 = vmatprep.subr.mxu0 0.0
        %880 = vmatpush1.msra.mxu0 0.0
        %881 = vmatprep.subr.mxu0 0.0
        %882 = vmatpush1.msra.mxu0 0.0
        %883 = vmatprep.subr.mxu0 0.0
        %884 = vmatpush1.msra.mxu0 0.0
        %885 = vmatprep.subr.mxu0 0.0
        %886 = vmatpush1.msra.mxu0 0.0
        %887 = vmatprep.subr.mxu0 0.0
        %888 = vmatpush1.msra.mxu0 0.0
        %889 = vmatprep.subr.mxu0 0.0
        %890 = vmatpush1.msra.mxu0 0.0
        %891 = vmatprep.subr.mxu0 0.0
        %892 = vmatpush1.msra.mxu0 0.0
        %893 = vmatprep.subr.mxu0 0.0
        %894 = vmatpush1.msra.mxu0 0.0
        %895 = vmatprep.subr.mxu0 0.0
        %896 = vmatpush1.msra.mxu0 0.0
        %897 = vmatprep.mubr.f32.mxu0 0.0
        %898 = vmatmul.mubr.f32.gmra.mrb[0].mxu0 %v828
        %v899 = vpop.f32.mrb[0].mxu0
        %v900 = vadd.f32 %v641, %v899
        %v901 = vpop.f32.mrb[0].mxu0
        %902 = vmatprep.mubr.f32.mxu0 0.0
        %903 = vmatmul.mubr.f32.gmra.mrb[0].mxu0 %v829
        %v904 = vpop.f32.mrb[0].mxu0
        %v905 = vadd.f32 %v641, %v904
        %v906 = vpop.f32.mrb[0].mxu0
        %907 = vmatprep.mubr.f32.mxu0 0.0
        %908 = vmatmul.mubr.f32.gmra.mrb[0].mxu0 %v830
        %v909 = vpop.f32.mrb[0].mxu0
        %v910 = vadd.f32 %v641, %v909
        %v911 = vpop.f32.mrb[0].mxu0
        %912 = vmatprep.mubr.f32.mxu0 0.0
        %913 = vmatmul.mubr.f32.gmra.mrb[0].mxu0 %v831
        %v914 = vpop.f32.mrb[0].mxu0
        %v915 = vadd.f32 %v641, %v914
        %v916 = vpop.f32.mrb[0].mxu0
        %917 = vmatprep.mubr.f32.mxu0 0.0
        %918 = vmatmul.mubr.f32.gmra.mrb[0].mxu0 %v832
        %v919 = vpop.f32.mrb[0].mxu0
        %v920 = vadd.f32 %v641, %v919
        %v921 = vpop.f32.mrb[0].mxu0
        %922 = vdwg.mxu0
        %v923 = vld [vmem:[#allocation6] sm:$0xff]
        %v924 = vld [vmem:[#allocation6 + $0x8] sm:$0xff]
        %v925 = vld [vmem:[#allocation6 + $0x10] sm:$0xff]
        %v926 = vld [vmem:[#allocation6 + $0x18] sm:$0xff]
        %v927 = vld [vmem:[#allocation6 + $0x20] sm:$0xff]
        %v928 = vld [vmem:[#allocation6 + $0x28] sm:$0xff]
        %v929 = vld [vmem:[#allocation6 + $0x30] sm:$0xff]
        %v930 = vld [vmem:[#allocation6 + $0x38] sm:$0xff]
        %v931 = vld [vmem:[#allocation6 + $0x40] sm:$0xff]
        %v932 = vld [vmem:[#allocation6 + $0x48] sm:$0xff]
        %v933 = vld [vmem:[#allocation6 + $0x50] sm:$0xff]
        %v934 = vld [vmem:[#allocation6 + $0x58] sm:$0xff]
        %v935 = vld [vmem:[#allocation6 + $0x60] sm:$0xff]
        %v936 = vld [vmem:[#allocation6 + $0x68] sm:$0xff]
        %v937 = vld [vmem:[#allocation6 + $0x70] sm:$0xff]
        %v938 = vld [vmem:[#allocation6 + $0x78] sm:$0xff]
        %v939 = vld [vmem:[#allocation7] sm:$0xff]
        %v940 = vld [vmem:[#allocation7 + $0x8] sm:$0xff]
        %v941 = vld [vmem:[#allocation7 + $0x10] sm:$0xff]
        %v942 = vld [vmem:[#allocation7 + $0x18] sm:$0xff]
        %v943 = vld [vmem:[#allocation7 + $0x20] sm:$0xff]
        %v944 = vld [vmem:[#allocation7 + $0x28] sm:$0xff]
        %v945 = vld [vmem:[#allocation7 + $0x30] sm:$0xff]
        %v946 = vld [vmem:[#allocation7 + $0x38] sm:$0xff]
        %v947 = vld [vmem:[#allocation7 + $0x40] sm:$0xff]
        %v948 = vld [vmem:[#allocation7 + $0x48] sm:$0xff]
        %v949 = vld [vmem:[#allocation7 + $0x50] sm:$0xff]
        %v950 = vld [vmem:[#allocation7 + $0x58] sm:$0xff]
        %v951 = vld [vmem:[#allocation7 + $0x60] sm:$0xff]
        %v952 = vld [vmem:[#allocation7 + $0x68] sm:$0xff]
        %v953 = vld [vmem:[#allocation7 + $0x70] sm:$0xff]
        %v954 = vld [vmem:[#allocation7 + $0x78] sm:$0xff]
        %955 = vmatprep.subr.mxu0 0.0
        %956 = vmatpush1.msra.mxu0 %v939
        %957 = vmatprep.subr.mxu0 0.0
        %958 = vmatpush1.msra.mxu0 %v940
        %959 = vmatprep.subr.mxu0 0.0
        %960 = vmatpush1.msra.mxu0 %v941
        %961 = vmatprep.subr.mxu0 0.0
        %962 = vmatpush1.msra.mxu0 %v942
        %963 = vmatprep.subr.mxu0 0.0
        %964 = vmatpush1.msra.mxu0 %v943
        %965 = vmatprep.subr.mxu0 0.0
        %966 = vmatpush1.msra.mxu0 %v944
        %967 = vmatprep.subr.mxu0 0.0
        %968 = vmatpush1.msra.mxu0 %v945
        %969 = vmatprep.subr.mxu0 0.0
        %970 = vmatpush1.msra.mxu0 %v946
        %971 = vmatprep.subr.mxu0 0.0
        %972 = vmatpush1.msra.mxu0 %v947
        %973 = vmatprep.subr.mxu0 0.0
        %974 = vmatpush1.msra.mxu0 %v948
        %975 = vmatprep.subr.mxu0 0.0
        %976 = vmatpush1.msra.mxu0 %v949
        %977 = vmatprep.subr.mxu0 0.0
        %978 = vmatpush1.msra.mxu0 %v950
        %979 = vmatprep.subr.mxu0 0.0
        %980 = vmatpush1.msra.mxu0 %v951
        %981 = vmatprep.subr.mxu0 0.0
        %982 = vmatpush1.msra.mxu0 %v952
        %983 = vmatprep.subr.mxu0 0.0
        %984 = vmatpush1.msra.mxu0 %v953
        %985 = vmatprep.subr.mxu0 0.0
        %986 = vmatpush1.msra.mxu0 %v954
        %987 = vmatprep.subr.mxu0 0.0
        %988 = vmatpush1.msra.mxu0 0.0
        %989 = vmatprep.subr.mxu0 0.0
        %990 = vmatpush1.msra.mxu0 0.0
        %991 = vmatprep.subr.mxu0 0.0
        %992 = vmatpush1.msra.mxu0 0.0
        %993 = vmatprep.subr.mxu0 0.0
        %994 = vmatpush1.msra.mxu0 0.0
        %995 = vmatprep.subr.mxu0 0.0
        %996 = vmatpush1.msra.mxu0 0.0
        %997 = vmatprep.subr.mxu0 0.0
        %998 = vmatpush1.msra.mxu0 0.0
        %999 = vmatprep.subr.mxu0 0.0
        %1000 = vmatpush1.msra.mxu0 0.0
        %1001 = vmatprep.subr.mxu0 0.0
        %1002 = vmatpush1.msra.mxu0 0.0
        %1003 = vmatprep.subr.mxu0 0.0
        %1004 = vmatpush1.msra.mxu0 0.0
        %1005 = vmatprep.subr.mxu0 0.0
        %1006 = vmatpush1.msra.mxu0 0.0
        %1007 = vmatprep.subr.mxu0 0.0
        %1008 = vmatpush1.msra.mxu0 0.0
        %1009 = vmatprep.subr.mxu0 0.0
        %1010 = vmatpush1.msra.mxu0 0.0
        %1011 = vmatprep.subr.mxu0 0.0
        %1012 = vmatpush1.msra.mxu0 0.0
        %1013 = vmatprep.subr.mxu0 0.0
        %1014 = vmatpush1.msra.mxu0 0.0
        %1015 = vmatprep.subr.mxu0 0.0
        %1016 = vmatpush1.msra.mxu0 0.0
        %1017 = vmatprep.subr.mxu0 0.0
        %1018 = vmatpush1.msra.mxu0 0.0
        %1019 = vmatprep.mubr.f32.mxu0 0.0
        %1020 = vmatmul.mubr.f32.gmra.mrb[0].mxu0 %v900
        %v1021 = vpop.f32.mrb[0].mxu0
        %v1022 = vadd.f32 0.0, %v1021
        %v1023 = vpop.f32.mrb[0].mxu0
        %1024 = vmatprep.mubr.f32.mxu0 0.0
        %1025 = vmatmul.mubr.f32.gmra.mrb[0].mxu0 %v905
        %v1026 = vpop.f32.mrb[0].mxu0
        %v1027 = vadd.f32 0.0, %v1026
        %v1028 = vpop.f32.mrb[0].mxu0
        %1029 = vmatprep.mubr.f32.mxu0 0.0
        %1030 = vmatmul.mubr.f32.gmra.mrb[0].mxu0 %v910
        %v1031 = vpop.f32.mrb[0].mxu0
        %v1032 = vadd.f32 0.0, %v1031
        %v1033 = vpop.f32.mrb[0].mxu0
        %1034 = vmatprep.mubr.f32.mxu0 0.0
        %1035 = vmatmul.mubr.f32.gmra.mrb[0].mxu0 %v915
        %v1036 = vpop.f32.mrb[0].mxu0
        %v1037 = vadd.f32 0.0, %v1036
        %v1038 = vpop.f32.mrb[0].mxu0
        %1039 = vmatprep.mubr.f32.mxu0 0.0
        %1040 = vmatmul.mubr.f32.gmra.mrb[0].mxu0 %v920
        %v1041 = vpop.f32.mrb[0].mxu0
        %v1042 = vadd.f32 0.0, %v1041
        %v1043 = vpop.f32.mrb[0].mxu0
        %1044 = vdwg.mxu0
        %1045 = vmatprep.subr.mxu0 0.0
        %1046 = vmatpush1.msra.mxu0 %v923
        %1047 = vmatprep.subr.mxu0 0.0
        %1048 = vmatpush1.msra.mxu0 %v924
        %1049 = vmatprep.subr.mxu0 0.0
        %1050 = vmatpush1.msra.mxu0 %v925
        %1051 = vmatprep.subr.mxu0 0.0
        %1052 = vmatpush1.msra.mxu0 %v926
        %1053 = vmatprep.subr.mxu0 0.0
        %1054 = vmatpush1.msra.mxu0 %v927
        %1055 = vmatprep.subr.mxu0 0.0
        %1056 = vmatpush1.msra.mxu0 %v928
        %1057 = vmatprep.subr.mxu0 0.0
        %1058 = vmatpush1.msra.mxu0 %v929
        %1059 = vmatprep.subr.mxu0 0.0
        %1060 = vmatpush1.msra.mxu0 %v930
        %1061 = vmatprep.subr.mxu0 0.0
        %1062 = vmatpush1.msra.mxu0 %v931
        %1063 = vmatprep.subr.mxu0 0.0
        %1064 = vmatpush1.msra.mxu0 %v932
        %1065 = vmatprep.subr.mxu0 0.0
        %1066 = vmatpush1.msra.mxu0 %v933
        %1067 = vmatprep.subr.mxu0 0.0
        %1068 = vmatpush1.msra.mxu0 %v934
        %1069 = vmatprep.subr.mxu0 0.0
        %1070 = vmatpush1.msra.mxu0 %v935
        %1071 = vmatprep.subr.mxu0 0.0
        %1072 = vmatpush1.msra.mxu0 %v936
        %1073 = vmatprep.subr.mxu0 0.0
        %1074 = vmatpush1.msra.mxu0 %v937
        %1075 = vmatprep.subr.mxu0 0.0
        %1076 = vmatpush1.msra.mxu0 %v938
        %1077 = vmatprep.subr.mxu0 0.0
        %1078 = vmatpush1.msra.mxu0 0.0
        %1079 = vmatprep.subr.mxu0 0.0
        %1080 = vmatpush1.msra.mxu0 0.0
        %1081 = vmatprep.subr.mxu0 0.0
        %1082 = vmatpush1.msra.mxu0 0.0
        %1083 = vmatprep.subr.mxu0 0.0
        %1084 = vmatpush1.msra.mxu0 0.0
        %1085 = vmatprep.subr.mxu0 0.0
        %1086 = vmatpush1.msra.mxu0 0.0
        %1087 = vmatprep.subr.mxu0 0.0
        %1088 = vmatpush1.msra.mxu0 0.0
        %1089 = vmatprep.subr.mxu0 0.0
        %1090 = vmatpush1.msra.mxu0 0.0
        %1091 = vmatprep.subr.mxu0 0.0
        %1092 = vmatpush1.msra.mxu0 0.0
        %1093 = vmatprep.subr.mxu0 0.0
        %1094 = vmatpush1.msra.mxu0 0.0
        %1095 = vmatprep.subr.mxu0 0.0
        %1096 = vmatpush1.msra.mxu0 0.0
        %1097 = vmatprep.subr.mxu0 0.0
        %1098 = vmatpush1.msra.mxu0 0.0
        %1099 = vmatprep.subr.mxu0 0.0
        %1100 = vmatpush1.msra.mxu0 0.0
        %1101 = vmatprep.subr.mxu0 0.0
        %1102 = vmatpush1.msra.mxu0 0.0
        %1103 = vmatprep.subr.mxu0 0.0
        %1104 = vmatpush1.msra.mxu0 0.0
        %1105 = vmatprep.subr.mxu0 0.0
        %1106 = vmatpush1.msra.mxu0 0.0
        %1107 = vmatprep.subr.mxu0 0.0
        %1108 = vmatpush1.msra.mxu0 0.0
        %1109 = vmatprep.mubr.f32.mxu0 0.0
        %1110 = vmatmul.mubr.f32.gmra.mrb[0].mxu0 %v710
        %v1111 = vpop.f32.mrb[0].mxu0
        %v1112 = vadd.f32 %v1022, %v1111
        %v1113 = vpop.f32.mrb[0].mxu0
        %1114 = vmatprep.mubr.f32.mxu0 0.0
        %1115 = vmatmul.mubr.f32.gmra.mrb[0].mxu0 %v715
        %v1116 = vpop.f32.mrb[0].mxu0
        %v1117 = vadd.f32 %v1027, %v1116
        %v1118 = vpop.f32.mrb[0].mxu0
        %1119 = vmatprep.mubr.f32.mxu0 0.0
        %1120 = vmatmul.mubr.f32.gmra.mrb[0].mxu0 %v720
        %v1121 = vpop.f32.mrb[0].mxu0
        %v1122 = vadd.f32 %v1032, %v1121
        %v1123 = vpop.f32.mrb[0].mxu0
        %1124 = vmatprep.mubr.f32.mxu0 0.0
        %1125 = vmatmul.mubr.f32.gmra.mrb[0].mxu0 %v725
        %v1126 = vpop.f32.mrb[0].mxu0
        %v1127 = vadd.f32 %v1037, %v1126
        %v1128 = vpop.f32.mrb[0].mxu0
        %1129 = vmatprep.mubr.f32.mxu0 0.0
        %1130 = vmatmul.mubr.f32.gmra.mrb[0].mxu0 %v730
        %v1131 = vpop.f32.mrb[0].mxu0
        %v1132 = vadd.f32 %v1042, %v1131
        %v1133 = vpop.f32.mrb[0].mxu0
        %1134 = vdwg.mxu0
        %v1135 = vld [vmem:[%s8] sm:$0x1]
        %v1137 = vlaneseq
        %v1138 = vshrl.u32 %v1137, 7
        %v1139 = vsub.s32 0, %v1138
        %v1140 = vrot.slane %v1135, %v1139
        %v1142 = vadd.f32 %v1112, %v1140
        %v1143 = vadd.f32 %v1117, %v1140
        %v1144 = vadd.f32 %v1122, %v1140
        %v1145 = vadd.f32 %v1127, %v1140
        %v1146 = vadd.f32 %v1132, %v1140
        %v1147 = vld [vmem:[%s10] sm:$0xff]
        %v1148 = vld [vmem:[%s10 + $0x8] sm:$0xff]
        %v1149 = vld [vmem:[%s10 + $0x10] sm:$0xff]
        %v1150 = vld [vmem:[%s10 + $0x18] sm:$0xff]
        %v1151 = vld [vmem:[%s10 + $0x20] sm:$0xff]
        %v1152 = vld [vmem:[%s10 + $0x28] sm:$0xff]
        %v1153 = vld [vmem:[%s10 + $0x30] sm:$0xff]
        %v1154 = vld [vmem:[%s10 + $0x38] sm:$0xff]
        %v1155 = vld [vmem:[%s10 + $0x40] sm:$0xff]
        %v1156 = vld [vmem:[%s10 + $0x48] sm:$0xff]
        %v1157 = vld [vmem:[%s10 + $0x50] sm:$0xff]
        %v1158 = vld [vmem:[%s10 + $0x58] sm:$0xff]
        %v1159 = vld [vmem:[%s10 + $0x60] sm:$0xff]
        %v1160 = vld [vmem:[%s10 + $0x68] sm:$0xff]
        %v1161 = vld [vmem:[%s10 + $0x70] sm:$0xff]
        %v1162 = vld [vmem:[%s10 + $0x78] sm:$0xff]
        %1163 = vmatprep.subr.mxu0 0.0
        %1164 = vmatpush1.msra.mxu0 %v1147
        %1165 = vmatprep.subr.mxu0 0.0
        %1166 = vmatpush1.msra.mxu0 %v1148
        %1167 = vmatprep.subr.mxu0 0.0
        %1168 = vmatpush1.msra.mxu0 %v1149
        %1169 = vmatprep.subr.mxu0 0.0
        %1170 = vmatpush1.msra.mxu0 %v1150
        %1171 = vmatprep.subr.mxu0 0.0
        %1172 = vmatpush1.msra.mxu0 %v1151
        %1173 = vmatprep.subr.mxu0 0.0
        %1174 = vmatpush1.msra.mxu0 %v1152
        %1175 = vmatprep.subr.mxu0 0.0
        %1176 = vmatpush1.msra.mxu0 %v1153
        %1177 = vmatprep.subr.mxu0 0.0
        %1178 = vmatpush1.msra.mxu0 %v1154
        %1179 = vmatprep.subr.mxu0 0.0
        %1180 = vmatpush1.msra.mxu0 %v1155
        %1181 = vmatprep.subr.mxu0 0.0
        %1182 = vmatpush1.msra.mxu0 %v1156
        %1183 = vmatprep.subr.mxu0 0.0
        %1184 = vmatpush1.msra.mxu0 %v1157
        %1185 = vmatprep.subr.mxu0 0.0
        %1186 = vmatpush1.msra.mxu0 %v1158
        %1187 = vmatprep.subr.mxu0 0.0
        %1188 = vmatpush1.msra.mxu0 %v1159
        %1189 = vmatprep.subr.mxu0 0.0
        %1190 = vmatpush1.msra.mxu0 %v1160
        %1191 = vmatprep.subr.mxu0 0.0
        %1192 = vmatpush1.msra.mxu0 %v1161
        %1193 = vmatprep.subr.mxu0 0.0
        %1194 = vmatpush1.msra.mxu0 %v1162
        %1195 = vmatprep.subr.mxu0 0.0
        %1196 = vmatpush1.msra.mxu0 0.0
        %1197 = vmatprep.subr.mxu0 0.0
        %1198 = vmatpush1.msra.mxu0 0.0
        %1199 = vmatprep.subr.mxu0 0.0
        %1200 = vmatpush1.msra.mxu0 0.0
        %1201 = vmatprep.subr.mxu0 0.0
        %1202 = vmatpush1.msra.mxu0 0.0
        %1203 = vmatprep.subr.mxu0 0.0
        %1204 = vmatpush1.msra.mxu0 0.0
        %1205 = vmatprep.subr.mxu0 0.0
        %1206 = vmatpush1.msra.mxu0 0.0
        %1207 = vmatprep.subr.mxu0 0.0
        %1208 = vmatpush1.msra.mxu0 0.0
        %1209 = vmatprep.subr.mxu0 0.0
        %1210 = vmatpush1.msra.mxu0 0.0
        %1211 = vmatprep.subr.mxu0 0.0
        %1212 = vmatpush1.msra.mxu0 0.0
        %1213 = vmatprep.subr.mxu0 0.0
        %1214 = vmatpush1.msra.mxu0 0.0
        %1215 = vmatprep.subr.mxu0 0.0
        %1216 = vmatpush1.msra.mxu0 0.0
        %1217 = vmatprep.subr.mxu0 0.0
        %1218 = vmatpush1.msra.mxu0 0.0
        %1219 = vmatprep.subr.mxu0 0.0
        %1220 = vmatpush1.msra.mxu0 0.0
        %1221 = vmatprep.subr.mxu0 0.0
        %1222 = vmatpush1.msra.mxu0 0.0
        %1223 = vmatprep.subr.mxu0 0.0
        %1224 = vmatpush1.msra.mxu0 0.0
        %1225 = vmatprep.subr.mxu0 0.0
        %1226 = vmatpush1.msra.mxu0 0.0
        %1227 = vmatprep.mubr.f32.mxu0 0.0
        %1228 = vmatmul.mubr.f32.gmra.mrb[0].mxu0 %v1142
        %v1229 = vpop.f32.mrb[0].mxu0
        %v1230 = vadd.f32 0.0, %v1229
        %v1231 = vpop.f32.mrb[0].mxu0
        %1232 = vmatprep.mubr.f32.mxu0 0.0
        %1233 = vmatmul.mubr.f32.gmra.mrb[0].mxu0 %v1143
        %v1234 = vpop.f32.mrb[0].mxu0
        %v1235 = vadd.f32 0.0, %v1234
        %v1236 = vpop.f32.mrb[0].mxu0
        %1237 = vmatprep.mubr.f32.mxu0 0.0
        %1238 = vmatmul.mubr.f32.gmra.mrb[0].mxu0 %v1144
        %v1239 = vpop.f32.mrb[0].mxu0
        %v1240 = vadd.f32 0.0, %v1239
        %v1241 = vpop.f32.mrb[0].mxu0
        %1242 = vmatprep.mubr.f32.mxu0 0.0
        %1243 = vmatmul.mubr.f32.gmra.mrb[0].mxu0 %v1145
        %v1244 = vpop.f32.mrb[0].mxu0
        %v1245 = vadd.f32 0.0, %v1244
        %v1246 = vpop.f32.mrb[0].mxu0
        %1247 = vmatprep.mubr.f32.mxu0 0.0
        %1248 = vmatmul.mubr.f32.gmra.mrb[0].mxu0 %v1146
        %v1249 = vpop.f32.mrb[0].mxu0
        %v1250 = vadd.f32 0.0, %v1249
        %v1251 = vpop.f32.mrb[0].mxu0
        %1252 = vdwg.mxu0
        %v1253 = vld [vmem:[%s489] sm:$0xff]
        %v1254 = vld [vmem:[%s489 + $0x8] sm:$0xff]
        %v1255 = vld [vmem:[%s489 + $0x10] sm:$0xff]
        %v1256 = vld [vmem:[%s489 + $0x18] sm:$0xff]
        %v1257 = vld [vmem:[%s489 + $0x20] sm:$0xff]
        %v1258 = vmul.f32 %v1253, %v1230
        %v1259 = vmul.f32 %v1254, %v1235
        %v1260 = vmul.f32 %v1255, %v1240
        %v1261 = vmul.f32 %v1256, %v1245
        %v1262 = vmul.f32 %v1257, %v1250
        %vm1263 = vcmask 31744
        %v1264 = vsel %vm1263, %v1258, 0.0
        %1265 = vadd.xlane.f32.xlu0 %v1264
        %v1266 = vpop.xlane.xlu0 %1265
        %v1267 = vsel %vm1263, %v1259, 0.0
        %1268 = vadd.xlane.f32.xlu0 %v1267
        %v1269 = vpop.xlane.xlu0 %1268
        %v1270 = vsel %vm1263, %v1260, 0.0
        %1271 = vadd.xlane.f32.xlu0 %v1270
        %v1272 = vpop.xlane.xlu0 %1271
        %v1273 = vsel %vm1263, %v1261, 0.0
        %1274 = vadd.xlane.f32.xlu0 %v1273
        %v1275 = vpop.xlane.xlu0 %1274
        %v1276 = vsel %vm1263, %v1262, 0.0
        %1277 = vadd.xlane.f32.xlu0 %v1276
        %v1278 = vpop.xlane.xlu0 %1277
        %vm1279 = vcmask 7168
        %1280 = vst.msk [vmem:[%s495] sm:$0xff] %vm1279, %v1266
        %1281 = vst.msk [vmem:[%s495 + $0x8] sm:$0xff] %vm1279, %v1269
        %1282 = vst.msk [vmem:[%s495 + $0x10] sm:$0xff] %vm1279, %v1272
        %1283 = vst.msk [vmem:[%s495 + $0x18] sm:$0xff] %vm1279, %v1275
        %1284 = vst.msk [vmem:[%s495 + $0x20] sm:$0xff] %vm1279, %v1278
        %s1285 = smul.u32 5, %s27
        %p1286 = scmp.lt.s32.totalorder %s1285, 24
        %s1287 = scalar_select %p1286, %s1285, 24
        %s1288 = smul.addr %s1287, 8
        %s1289 = scalar_lea.vmem %s11, %s1288
        // Predicated region
        $region81: #{tpu_custom_call.1} parent=63 // pred_check
          %p1290 = pneg %p291
        $region82: #{tpu_custom_call.1} parent=63 // pred_check_branch
          %1292 = sbr.rel (%p1290) target = $region84
        $region83: #{tpu_custom_call.1} parent=63 // pred_region
          %s1293 = smul.u32 5, %s27
        $region84: #{tpu_custom_call.1} parent=63 // pred_fallthru
          _
      $region64: #{tpu_custom_call.1} parent=5 // pred_fallthru
        _
      %p1294 = scmp.le.s32.totalorder 2, %s22
      // Predicated region
      $region85: #{tpu_custom_call.1} parent=5 // pred_check
        %p1295 = pneg %p1294
      $region86: #{tpu_custom_call.1} parent=5 // pred_check_branch
        %1297 = sbr.rel (%p1295) target = $region88
      $region87: #{tpu_custom_call.1} parent=5 // pred_region
        %s1298 = ssub.s32 %s22, 2
        // Predicated region
        $region89: #{tpu_custom_call.1} parent=87 // pred_check
          %p1299 = pneg %p297
        $region90: #{tpu_custom_call.1} parent=87 // pred_check_branch
          %1301 = sbr.rel (%p1299) target = $region92
        $region91: #{tpu_custom_call.1} parent=87 // pred_region
          %s1302 = smul.u32 5, %s28
          %p1303 = scmp.lt.s32.totalorder %s1302, 24
          %s1304 = scalar_select %p1303, %s1302, 24
          %s1305 = smul.addr %s1304, 8
          %s1306 = scalar_lea.vmem %s11, %s1305
        $region92: #{tpu_custom_call.1} parent=87 // pred_fallthru
          _
      $region88: #{tpu_custom_call.1} parent=5 // pred_fallthru
        _
    $region6: #{tpu_custom_call.1} parent=1 // loop_footer
      %s26 = sadd.s32 1, %s22
    $region7: #{tpu_custom_call.1} parent=1 // loop_footer_branch
      %21 = sbr.rel target = $region3
    $region8: #{tpu_custom_call.1} parent=1 // loop_exit
      _
    %1307 = vsyncpa [#allocation3], 1
    %s1308 = scalar_lea.sflag [#allocation3], 1
    %1309 = vsyncpa %s1308, 1
    %1310 = vsyncpa [#allocation5], 1
    %1311 = vsyncpa [#allocation8], 1

</llo_original>
